<compile_context>
chip_gen: v7x
topology: tpu7x:2x2x1
jax: 0.10.0
libtpu: 0.0.40
codegen_flags: <defaults>
</compile_context>

<pallas_src>
import jax
import jax.numpy as jnp
from jax.experimental import pallas as pl
from jax.experimental.pallas import tpu as pltpu

D_IN = 5
H = 50
D_OUT = 5
N_HIDDEN = 6


def fnn_kernel(x_ref,
               w1_ref, b1_ref, w2_ref, b2_ref, w3_ref, b3_ref,
               w4_ref, b4_ref, w5_ref, b5_ref, w6_ref, b6_ref,
               wo_ref, bo_ref,
               hid_ref, out_ref):
    """Full forward pass for one batch tile.

    hid_ref : (tile, 6*50) packed hidden activations [x1 | x2 | ... | x6]
    out_ref : (tile, 5)    final linear output (no ReLU)
    """
    h = x_ref[...]
    hiddens = []
    for w_ref, b_ref in ((w1_ref, b1_ref), (w2_ref, b2_ref), (w3_ref, b3_ref),
                         (w4_ref, b4_ref), (w5_ref, b5_ref), (w6_ref, b6_ref)):
        h = jnp.dot(h, w_ref[...], preferred_element_type=jnp.float32) + b_ref[...]
        h = jnp.maximum(h, 0.0)
        hiddens.append(h)

    # One lane-dense slab write per step instead of six 50-lane masked stores.
    hid_ref[...] = jnp.concatenate(hiddens, axis=-1).astype(hid_ref.dtype)

    out = jnp.dot(h, wo_ref[...], preferred_element_type=jnp.float32) + bo_ref[...]
    out_ref[...] = out.astype(out_ref.dtype)


def _round_up(n, m):
    return ((n + m - 1) // m) * m


def fnn_forward(x, params, *, batch_tile=None, act_dtype=jnp.float32):
    """x: (B, 5) float32. params: list of 7 (W_in_out, b_1_out) pairs.

    Returns [x1, x2, x3, x4, x5, x6, output], matching the PyTorch module.
    act_dtype controls the storage dtype of the six intermediates (keep fp32
    to match PyTorch exactly; bf16 halves HBM writeback bytes if the
    intermediates only feed a backward pass).
    """
    B, d_in = x.shape
    assert d_in == D_IN

    if batch_tile is None:
        # Large tiles amortize per-step overhead; keep >=2 grid steps so the
        # "parallel" grid axis can shard across v7x's two TensorCores.
        batch_tile = max(8, min(1024, _round_up(pl.cdiv(B, 2), 8)))
    batch_tile = min(batch_tile, _round_up(B, 8))   # keep a multiple of 8
    grid = (pl.cdiv(B, batch_tile),)
    # NOTE: if B % batch_tile != 0 the last block reads past the end of x;
    # rows are independent so the first B output rows are still exact.

    # Activation tiles move with the batch grid index; parameters are
    # replicated (constant index_map -> no re-DMA across steps).
    def act_spec(feat):
        return pl.BlockSpec((batch_tile, feat), lambda i: (i, 0))

    def param_spec(shape):
        return pl.BlockSpec(shape, lambda i: (0,) * len(shape))

    in_specs = [act_spec(D_IN)]
    flat_params = []
    for (w, b) in params:
        in_specs.append(param_spec(w.shape))
        in_specs.append(param_spec(b.shape))
        flat_params += [w, b]

    out_specs = [act_spec(N_HIDDEN * H), act_spec(D_OUT)]
    out_shape = [jax.ShapeDtypeStruct((B, N_HIDDEN * H), act_dtype),
                 jax.ShapeDtypeStruct((B, D_OUT), jnp.float32)]

    # Advisory cost hint for XLA scheduling around the custom call.
    flops = 2 * B * (D_IN * H + (N_HIDDEN - 1) * H * H + H * D_OUT)
    param_bytes = sum(int(w.size) * 4 + int(b.size) * 4 for (w, b) in params)
    bytes_accessed = (B * D_IN * 4
                      + B * N_HIDDEN * H * jnp.dtype(act_dtype).itemsize
                      + B * D_OUT * 4
                      + param_bytes)

    fn = pl.pallas_call(
        fnn_kernel,
        out_shape=out_shape,
        grid_spec=pltpu.PrefetchScalarGridSpec(
            num_scalar_prefetch=0,
            grid=grid,
            in_specs=in_specs,
            out_specs=out_specs,
        ),
        compiler_params=pltpu.CompilerParams(
            dimension_semantics=("parallel",),
            vmem_limit_bytes=48 * 1024 * 1024,  # > default scoped, < v7x 64 MiB physical
        ),
        cost_estimate=pl.CostEstimate(
            flops=flops, transcendentals=0, bytes_accessed=bytes_accessed),
    )
    hid, out = fn(x, *flat_params)

    # Split the packed slab back into the module's return list. Inside a larger
    # jit these slices fuse into their consumers; standalone they are cheap copies.
    outs = [hid[:, i * H:(i + 1) * H] for i in range(N_HIDDEN)]
    outs.append(out)
    return outs


def init_params(key):
    """Deterministic init mimicking PyTorch nn.Linear (uniform +-1/sqrt(fan_in)).
    Weights stored as (in_features, out_features); biases as (1, out_features)."""
    dims = [(D_IN, H), (H, H), (H, H), (H, H), (H, H), (H, H), (H, D_OUT)]
    params = []
    for (fan_in, fan_out) in dims:
        key, kw, kb = jax.random.split(key, 3)
        bound = 1.0 / jnp.sqrt(fan_in)
        w = jax.random.uniform(kw, (fan_in, fan_out), jnp.float32, -bound, bound)
        b = jax.random.uniform(kb, (1, fan_out), jnp.float32, -bound, bound)
        params.append((w, b))
    return params


def fnn_reference(x, params):
    """Plain-JAX reference for correctness checking."""
    outs = []
    a = x
    for i, (w, b) in enumerate(params):
        a = a @ w + b
        if i < len(params) - 1:
            a = jnp.maximum(a, 0.0)
        outs.append(a)
    return outs


if __name__ == "__main__":
    key = jax.random.PRNGKey(0)
    key, kx = jax.random.split(key)
    B = 64  # small test batch; large batches use tiles up to 1024 rows
    x = jax.random.normal(kx, (B, D_IN), jnp.float32)
    params = init_params(key)

    outs = fnn_forward(x, params)
    outs = jax.block_until_ready(outs)

    refs = fnn_reference(x, params)
    for got, ref in zip(outs, refs):
        assert got.shape == ref.shape
        assert jnp.allclose(got, ref, atol=1e-5, rtol=1e-5), "mismatch vs reference"

    print("KERNEL_OK")
</pallas_src>

<mosaic_0001>
module attributes {stable_mosaic.version = 11 : i64} {
  func.func @fnn_kernel(%arg0: i32, %arg1: memref<32x5xf32, #tpu.memory_space<vmem>>, %arg2: memref<5x50xf32, #tpu.memory_space<vmem>>, %arg3: memref<1x50xf32, #tpu.memory_space<vmem>>, %arg4: memref<50x50xf32, #tpu.memory_space<vmem>>, %arg5: memref<1x50xf32, #tpu.memory_space<vmem>>, %arg6: memref<50x50xf32, #tpu.memory_space<vmem>>, %arg7: memref<1x50xf32, #tpu.memory_space<vmem>>, %arg8: memref<50x50xf32, #tpu.memory_space<vmem>>, %arg9: memref<1x50xf32, #tpu.memory_space<vmem>>, %arg10: memref<50x50xf32, #tpu.memory_space<vmem>>, %arg11: memref<1x50xf32, #tpu.memory_space<vmem>>, %arg12: memref<50x50xf32, #tpu.memory_space<vmem>>, %arg13: memref<1x50xf32, #tpu.memory_space<vmem>>, %arg14: memref<50x5xf32, #tpu.memory_space<vmem>>, %arg15: memref<1x5xf32, #tpu.memory_space<vmem>>, %arg16: memref<32x300xf32, #tpu.memory_space<vmem>>, %arg17: memref<32x5xf32, #tpu.memory_space<vmem>>) attributes {dimension_semantics = [#tpu.dimension_semantics<parallel>], iteration_bounds = array<i64: 2>, scalar_prefetch = 0 : i64, scratch_operands = 0 : i64, tpu.core_type = #tpu.core_type<tc>, window_params = [{transform_indices = @transform_0, window_bounds = array<i64: 32, 5>}, {pipeline_mode = #tpu.pipeline_mode<synchronous>, transform_indices = @transform_1, window_bounds = array<i64: 5, 50>}, {pipeline_mode = #tpu.pipeline_mode<synchronous>, transform_indices = @transform_2, window_bounds = array<i64: 1, 50>}, {pipeline_mode = #tpu.pipeline_mode<synchronous>, transform_indices = @transform_3, window_bounds = array<i64: 50, 50>}, {pipeline_mode = #tpu.pipeline_mode<synchronous>, transform_indices = @transform_4, window_bounds = array<i64: 1, 50>}, {pipeline_mode = #tpu.pipeline_mode<synchronous>, transform_indices = @transform_5, window_bounds = array<i64: 50, 50>}, {pipeline_mode = #tpu.pipeline_mode<synchronous>, transform_indices = @transform_6, window_bounds = array<i64: 1, 50>}, {pipeline_mode = #tpu.pipeline_mode<synchronous>, transform_indices = @transform_7, window_bounds = array<i64: 50, 50>}, {pipeline_mode = #tpu.pipeline_mode<synchronous>, transform_indices = @transform_8, window_bounds = array<i64: 1, 50>}, {pipeline_mode = #tpu.pipeline_mode<synchronous>, transform_indices = @transform_9, window_bounds = array<i64: 50, 50>}, {pipeline_mode = #tpu.pipeline_mode<synchronous>, transform_indices = @transform_10, window_bounds = array<i64: 1, 50>}, {pipeline_mode = #tpu.pipeline_mode<synchronous>, transform_indices = @transform_11, window_bounds = array<i64: 50, 50>}, {pipeline_mode = #tpu.pipeline_mode<synchronous>, transform_indices = @transform_12, window_bounds = array<i64: 1, 50>}, {pipeline_mode = #tpu.pipeline_mode<synchronous>, transform_indices = @transform_13, window_bounds = array<i64: 50, 5>}, {pipeline_mode = #tpu.pipeline_mode<synchronous>, transform_indices = @transform_14, window_bounds = array<i64: 1, 5>}, {transform_indices = @transform_15, window_bounds = array<i64: 32, 300>}, {transform_indices = @transform_16, window_bounds = array<i64: 32, 5>}]} {
    %c0 = arith.constant 0 : index
    %c0_0 = arith.constant 0 : index
    %0 = vector.load %arg1[%c0, %c0_0] : memref<32x5xf32, #tpu.memory_space<vmem>>, vector<32x5xf32>
    %c0_1 = arith.constant 0 : index
    %c0_2 = arith.constant 0 : index
    %1 = vector.load %arg2[%c0_1, %c0_2] : memref<5x50xf32, #tpu.memory_space<vmem>>, vector<5x50xf32>
    %cst = arith.constant dense<0.000000e+00> : vector<32x50xf32>
    %2 = tpu.matmul %0, %1, %cst {dimension_numbers = #tpu.dot_dimension_numbers<[1], [0], [0], [1], [0, 0, 1, 1], [], []>} : vector<32x5xf32>, vector<5x50xf32>, vector<32x50xf32> -> vector<32x50xf32>
    %c0_3 = arith.constant 0 : index
    %c0_4 = arith.constant 0 : index
    %3 = vector.load %arg3[%c0_3, %c0_4] : memref<1x50xf32, #tpu.memory_space<vmem>>, vector<1x50xf32>
    %4 = vector.broadcast %3 : vector<1x50xf32> to vector<32x50xf32>
    %5 = arith.addf %2, %4 : vector<32x50xf32>
    %cst_5 = arith.constant 0.000000e+00 : f32
    %6 = vector.broadcast %cst_5 : f32 to vector<32x50xf32>
    %7 = arith.maximumf %5, %6 : vector<32x50xf32>
    %c0_6 = arith.constant 0 : index
    %c0_7 = arith.constant 0 : index
    %8 = vector.load %arg4[%c0_6, %c0_7] : memref<50x50xf32, #tpu.memory_space<vmem>>, vector<50x50xf32>
    %cst_8 = arith.constant dense<0.000000e+00> : vector<32x50xf32>
    %9 = tpu.matmul %7, %8, %cst_8 {dimension_numbers = #tpu.dot_dimension_numbers<[1], [0], [0], [1], [0, 0, 1, 1], [], []>} : vector<32x50xf32>, vector<50x50xf32>, vector<32x50xf32> -> vector<32x50xf32>
    %c0_9 = arith.constant 0 : index
    %c0_10 = arith.constant 0 : index
    %10 = vector.load %arg5[%c0_9, %c0_10] : memref<1x50xf32, #tpu.memory_space<vmem>>, vector<1x50xf32>
    %11 = vector.broadcast %10 : vector<1x50xf32> to vector<32x50xf32>
    %12 = arith.addf %9, %11 : vector<32x50xf32>
    %cst_11 = arith.constant 0.000000e+00 : f32
    %13 = vector.broadcast %cst_11 : f32 to vector<32x50xf32>
    %14 = arith.maximumf %12, %13 : vector<32x50xf32>
    %c0_12 = arith.constant 0 : index
    %c0_13 = arith.constant 0 : index
    %15 = vector.load %arg6[%c0_12, %c0_13] : memref<50x50xf32, #tpu.memory_space<vmem>>, vector<50x50xf32>
    %cst_14 = arith.constant dense<0.000000e+00> : vector<32x50xf32>
    %16 = tpu.matmul %14, %15, %cst_14 {dimension_numbers = #tpu.dot_dimension_numbers<[1], [0], [0], [1], [0, 0, 1, 1], [], []>} : vector<32x50xf32>, vector<50x50xf32>, vector<32x50xf32> -> vector<32x50xf32>
    %c0_15 = arith.constant 0 : index
    %c0_16 = arith.constant 0 : index
    %17 = vector.load %arg7[%c0_15, %c0_16] : memref<1x50xf32, #tpu.memory_space<vmem>>, vector<1x50xf32>
    %18 = vector.broadcast %17 : vector<1x50xf32> to vector<32x50xf32>
    %19 = arith.addf %16, %18 : vector<32x50xf32>
    %cst_17 = arith.constant 0.000000e+00 : f32
    %20 = vector.broadcast %cst_17 : f32 to vector<32x50xf32>
    %21 = arith.maximumf %19, %20 : vector<32x50xf32>
    %c0_18 = arith.constant 0 : index
    %c0_19 = arith.constant 0 : index
    %22 = vector.load %arg8[%c0_18, %c0_19] : memref<50x50xf32, #tpu.memory_space<vmem>>, vector<50x50xf32>
    %cst_20 = arith.constant dense<0.000000e+00> : vector<32x50xf32>
    %23 = tpu.matmul %21, %22, %cst_20 {dimension_numbers = #tpu.dot_dimension_numbers<[1], [0], [0], [1], [0, 0, 1, 1], [], []>} : vector<32x50xf32>, vector<50x50xf32>, vector<32x50xf32> -> vector<32x50xf32>
    %c0_21 = arith.constant 0 : index
    %c0_22 = arith.constant 0 : index
    %24 = vector.load %arg9[%c0_21, %c0_22] : memref<1x50xf32, #tpu.memory_space<vmem>>, vector<1x50xf32>
    %25 = vector.broadcast %24 : vector<1x50xf32> to vector<32x50xf32>
    %26 = arith.addf %23, %25 : vector<32x50xf32>
    %cst_23 = arith.constant 0.000000e+00 : f32
    %27 = vector.broadcast %cst_23 : f32 to vector<32x50xf32>
    %28 = arith.maximumf %26, %27 : vector<32x50xf32>
    %c0_24 = arith.constant 0 : index
    %c0_25 = arith.constant 0 : index
    %29 = vector.load %arg10[%c0_24, %c0_25] : memref<50x50xf32, #tpu.memory_space<vmem>>, vector<50x50xf32>
    %cst_26 = arith.constant dense<0.000000e+00> : vector<32x50xf32>
    %30 = tpu.matmul %28, %29, %cst_26 {dimension_numbers = #tpu.dot_dimension_numbers<[1], [0], [0], [1], [0, 0, 1, 1], [], []>} : vector<32x50xf32>, vector<50x50xf32>, vector<32x50xf32> -> vector<32x50xf32>
    %c0_27 = arith.constant 0 : index
    %c0_28 = arith.constant 0 : index
    %31 = vector.load %arg11[%c0_27, %c0_28] : memref<1x50xf32, #tpu.memory_space<vmem>>, vector<1x50xf32>
    %32 = vector.broadcast %31 : vector<1x50xf32> to vector<32x50xf32>
    %33 = arith.addf %30, %32 : vector<32x50xf32>
    %cst_29 = arith.constant 0.000000e+00 : f32
    %34 = vector.broadcast %cst_29 : f32 to vector<32x50xf32>
    %35 = arith.maximumf %33, %34 : vector<32x50xf32>
    %c0_30 = arith.constant 0 : index
    %c0_31 = arith.constant 0 : index
    %36 = vector.load %arg12[%c0_30, %c0_31] : memref<50x50xf32, #tpu.memory_space<vmem>>, vector<50x50xf32>
    %cst_32 = arith.constant dense<0.000000e+00> : vector<32x50xf32>
    %37 = tpu.matmul %35, %36, %cst_32 {dimension_numbers = #tpu.dot_dimension_numbers<[1], [0], [0], [1], [0, 0, 1, 1], [], []>} : vector<32x50xf32>, vector<50x50xf32>, vector<32x50xf32> -> vector<32x50xf32>
    %c0_33 = arith.constant 0 : index
    %c0_34 = arith.constant 0 : index
    %38 = vector.load %arg13[%c0_33, %c0_34] : memref<1x50xf32, #tpu.memory_space<vmem>>, vector<1x50xf32>
    %39 = vector.broadcast %38 : vector<1x50xf32> to vector<32x50xf32>
    %40 = arith.addf %37, %39 : vector<32x50xf32>
    %cst_35 = arith.constant 0.000000e+00 : f32
    %41 = vector.broadcast %cst_35 : f32 to vector<32x50xf32>
    %42 = arith.maximumf %40, %41 : vector<32x50xf32>
    %43 = tpu.concatenate %7, %14, %21, %28, %35, %42 in 1 : vector<32x50xf32>, vector<32x50xf32>, vector<32x50xf32>, vector<32x50xf32>, vector<32x50xf32>, vector<32x50xf32> -> vector<32x300xf32>
    %c0_36 = arith.constant 0 : index
    %c0_37 = arith.constant 0 : index
    %44 = vector.load %arg16[%c0_36, %c0_37] : memref<32x300xf32, #tpu.memory_space<vmem>>, vector<32x300xf32>
    tpu.vector_store %arg16[%c0_36, %c0_37], %43 {strides = array<i32>} : memref<32x300xf32, #tpu.memory_space<vmem>>, vector<32x300xf32>,
    %c0_38 = arith.constant 0 : index
    %c0_39 = arith.constant 0 : index
    %45 = vector.load %arg14[%c0_38, %c0_39] : memref<50x5xf32, #tpu.memory_space<vmem>>, vector<50x5xf32>
    %cst_40 = arith.constant dense<0.000000e+00> : vector<32x5xf32>
    %46 = tpu.matmul %42, %45, %cst_40 {dimension_numbers = #tpu.dot_dimension_numbers<[1], [0], [0], [1], [0, 0, 1, 1], [], []>} : vector<32x50xf32>, vector<50x5xf32>, vector<32x5xf32> -> vector<32x5xf32>
    %c0_41 = arith.constant 0 : index
    %c0_42 = arith.constant 0 : index
    %47 = vector.load %arg15[%c0_41, %c0_42] : memref<1x5xf32, #tpu.memory_space<vmem>>, vector<1x5xf32>
    %48 = vector.broadcast %47 : vector<1x5xf32> to vector<32x5xf32>
    %49 = arith.addf %46, %48 : vector<32x5xf32>
    %c0_43 = arith.constant 0 : index
    %c0_44 = arith.constant 0 : index
    %50 = vector.load %arg17[%c0_43, %c0_44] : memref<32x5xf32, #tpu.memory_space<vmem>>, vector<32x5xf32>
    tpu.vector_store %arg17[%c0_43, %c0_44], %49 {strides = array<i32>} : memref<32x5xf32, #tpu.memory_space<vmem>>, vector<32x5xf32>,
    return
  }
  func.func @transform_0(%arg0: i32) -> (i32, i32) {
    %c0_i32 = arith.constant 0 : i32
    %c0_i32_0 = arith.constant 0 : i32
    return %arg0, %c0_i32 : i32, i32
  }
  func.func @transform_1(%arg0: i32) -> (i32, i32) {
    %c0_i32 = arith.constant 0 : i32
    %c0_i32_0 = arith.constant 0 : i32
    %c0_i32_1 = arith.constant 0 : i32
    return %c0_i32, %c0_i32_0 : i32, i32
  }
  func.func @transform_2(%arg0: i32) -> (i32, i32) {
    %c0_i32 = arith.constant 0 : i32
    %c0_i32_0 = arith.constant 0 : i32
    %c0_i32_1 = arith.constant 0 : i32
    return %c0_i32, %c0_i32_0 : i32, i32
  }
  func.func @transform_3(%arg0: i32) -> (i32, i32) {
    %c0_i32 = arith.constant 0 : i32
    %c0_i32_0 = arith.constant 0 : i32
    %c0_i32_1 = arith.constant 0 : i32
    return %c0_i32, %c0_i32_0 : i32, i32
  }
  func.func @transform_4(%arg0: i32) -> (i32, i32) {
    %c0_i32 = arith.constant 0 : i32
    %c0_i32_0 = arith.constant 0 : i32
    %c0_i32_1 = arith.constant 0 : i32
    return %c0_i32, %c0_i32_0 : i32, i32
  }
  func.func @transform_5(%arg0: i32) -> (i32, i32) {
    %c0_i32 = arith.constant 0 : i32
    %c0_i32_0 = arith.constant 0 : i32
    %c0_i32_1 = arith.constant 0 : i32
    return %c0_i32, %c0_i32_0 : i32, i32
  }
  func.func @transform_6(%arg0: i32) -> (i32, i32) {
    %c0_i32 = arith.constant 0 : i32
    %c0_i32_0 = arith.constant 0 : i32
    %c0_i32_1 = arith.constant 0 : i32
    return %c0_i32, %c0_i32_0 : i32, i32
  }
  func.func @transform_7(%arg0: i32) -> (i32, i32) {
    %c0_i32 = arith.constant 0 : i32
    %c0_i32_0 = arith.constant 0 : i32
    %c0_i32_1 = arith.constant 0 : i32
    return %c0_i32, %c0_i32_0 : i32, i32
  }
  func.func @transform_8(%arg0: i32) -> (i32, i32) {
    %c0_i32 = arith.constant 0 : i32
    %c0_i32_0 = arith.constant 0 : i32
    %c0_i32_1 = arith.constant 0 : i32
    return %c0_i32, %c0_i32_0 : i32, i32
  }
  func.func @transform_9(%arg0: i32) -> (i32, i32) {
    %c0_i32 = arith.constant 0 : i32
    %c0_i32_0 = arith.constant 0 : i32
    %c0_i32_1 = arith.constant 0 : i32
    return %c0_i32, %c0_i32_0 : i32, i32
  }
  func.func @transform_10(%arg0: i32) -> (i32, i32) {
    %c0_i32 = arith.constant 0 : i32
    %c0_i32_0 = arith.constant 0 : i32
    %c0_i32_1 = arith.constant 0 : i32
    return %c0_i32, %c0_i32_0 : i32, i32
  }
  func.func @transform_11(%arg0: i32) -> (i32, i32) {
    %c0_i32 = arith.constant 0 : i32
    %c0_i32_0 = arith.constant 0 : i32
    %c0_i32_1 = arith.constant 0 : i32
    return %c0_i32, %c0_i32_0 : i32, i32
  }
  func.func @transform_12(%arg0: i32) -> (i32, i32) {
    %c0_i32 = arith.constant 0 : i32
    %c0_i32_0 = arith.constant 0 : i32
    %c0_i32_1 = arith.constant 0 : i32
    return %c0_i32, %c0_i32_0 : i32, i32
  }
  func.func @transform_13(%arg0: i32) -> (i32, i32) {
    %c0_i32 = arith.constant 0 : i32
    %c0_i32_0 = arith.constant 0 : i32
    %c0_i32_1 = arith.constant 0 : i32
    return %c0_i32, %c0_i32_0 : i32, i32
  }
  func.func @transform_14(%arg0: i32) -> (i32, i32) {
    %c0_i32 = arith.constant 0 : i32
    %c0_i32_0 = arith.constant 0 : i32
    %c0_i32_1 = arith.constant 0 : i32
    return %c0_i32, %c0_i32_0 : i32, i32
  }
  func.func @transform_15(%arg0: i32) -> (i32, i32) {
    %c0_i32 = arith.constant 0 : i32
    %c0_i32_0 = arith.constant 0 : i32
    return %arg0, %c0_i32 : i32, i32
  }
  func.func @transform_16(%arg0: i32) -> (i32, i32) {
    %c0_i32 = arith.constant 0 : i32
    %c0_i32_0 = arith.constant 0 : i32
    return %arg0, %c0_i32 : i32, i32
  }
}

</mosaic_0001>

<llo_original>
// kernel: tpu_custom_call.1
$region0: #{tpu_custom_call.1}
  #allocation0 [shape = 'u32[]', space=smem, size = 0x4, offset = 0x4, fixed_abs, tag = 'smem constant byte address 0x4 - core index']
  #allocation1 [shape = 'u32[144,128]{1,0:T(1,128)}', space=vmem, size = 0x12000, scoped, tag = 'internal scratch']
  %s0 = inlined_call_operand.vmem [shape: f32[64,5], index: 0, kind: input, shape index: {}]
  %s1 = inlined_call_operand.hbm [shape: f32[5,50], index: 1, kind: input, shape index: {}]
  %s2 = inlined_call_operand.vmem [shape: f32[1,50], index: 2, kind: input, shape index: {}]
  %s3 = inlined_call_operand.vmem [shape: f32[50,50], index: 3, kind: input, shape index: {}]
  %s4 = inlined_call_operand.hbm [shape: f32[1,50], index: 4, kind: input, shape index: {}]
  %s5 = inlined_call_operand.vmem [shape: f32[50,50], index: 5, kind: input, shape index: {}]
  %s6 = inlined_call_operand.hbm [shape: f32[1,50], index: 6, kind: input, shape index: {}]
  %s7 = inlined_call_operand.hbm [shape: f32[50,50], index: 7, kind: input, shape index: {}]
  %s8 = inlined_call_operand.hbm [shape: f32[1,50], index: 8, kind: input, shape index: {}]
  %s9 = inlined_call_operand.vmem [shape: f32[50,50], index: 9, kind: input, shape index: {}]
  %s10 = inlined_call_operand.hbm [shape: f32[1,50], index: 10, kind: input, shape index: {}]
  %s11 = inlined_call_operand.hbm [shape: f32[50,50], index: 11, kind: input, shape index: {}]
  %s12 = inlined_call_operand.vmem [shape: f32[1,50], index: 12, kind: input, shape index: {}]
  %s13 = inlined_call_operand.vmem [shape: f32[50,5], index: 13, kind: input, shape index: {}]
  %s14 = inlined_call_operand.vmem [shape: f32[1,5], index: 14, kind: input, shape index: {}]
  %s15 = inlined_call_operand.hbm [shape: f32[64,300], index: 15, kind: output, shape index: {0}]
  %s16 = inlined_call_operand.vmem [shape: f32[64,5], index: 16, kind: output, shape index: {1}]
  %17 = xla_tuple %s15, %s16
  %s18 = sld [smem:[#allocation0]]
  $region129: #{tpu_custom_call.1} parent=0
    _
  %s20 = ssub.s32 1, %s18
  %s21 = scalar_select 0, %s20, %s18
  $region1: #{tpu_custom_call.1} parent=0
    #allocation2 [shape = 'u8[4096]{0}', space=vmem, size = 0x1000, scoped, tag = 'input window, operand 1, single buffered']
    #allocation3 [shape = 's32[2]{0}', space=sflag, size = 0x8, scoped, tag = 'scoped memory for tpu_custom_call.1']
    #allocation4 [shape = 's32[2]{0}', space=sflag, size = 0x8, scoped, tag = 'scoped memory for tpu_custom_call.1']
    #allocation5 [shape = 'u8[512]{0}', space=vmem, size = 0x400, scoped, tag = 'input window, operand 4, single buffered']
    #allocation6 [shape = 's32[1]{0}', space=sflag, size = 0x4, scoped, tag = 'scoped memory for tpu_custom_call.1']
    #allocation7 [shape = 'u8[512]{0}', space=vmem, size = 0x400, scoped, tag = 'input window, operand 6, single buffered']
    #allocation8 [shape = 'u8[28672]{0}', space=vmem, size = 0x7000, scoped, tag = 'input window, operand 7, single buffered']
    #allocation9 [shape = 's32[1]{0}', space=sflag, size = 0x4, scoped, tag = 'scoped memory for tpu_custom_call.1']
    #allocation10 [shape = 'u8[512]{0}', space=vmem, size = 0x400, scoped, tag = 'input window, operand 8, single buffered']
    #allocation11 [shape = 'u8[512]{0}', space=vmem, size = 0x400, scoped, tag = 'input window, operand 10, single buffered']
    #allocation12 [shape = 's32[1]{0}', space=sflag, size = 0x4, scoped, tag = 'scoped memory for tpu_custom_call.1']
    #allocation13 [shape = 'u8[28672]{0}', space=vmem, size = 0x7000, scoped, tag = 'input window, operand 11, single buffered']
    #allocation14 [shape = 'u8[98304]{0}', space=vmem, size = 0x18000, scoped, tag = 'output window, operand 0']
    %22 = vsyncpa [#allocation3], 0
    %23 = vsyncpa [#allocation6], 0
    %24 = vsyncpa [#allocation9], 0
    %25 = vsyncpa [#allocation12], 0
    %26 = vsyncpa [#allocation4], 0
    %s27 = scalar_lea.sflag [#allocation4], 1
    %28 = vsyncpa %s27, 0
    loop: start=0, step=1, limit=4
    $region2: #{tpu_custom_call.1} parent=1 // loop_pre_header
      _
    $region3: #{tpu_custom_call.1} parent=1 // loop_header
      %s30 = sphi 0, %s34
      %p31 = scmp.ge.s32.totalorder %s30, 4
      %s40 = sphi 0, %s42
      %s43 = sphi 0, %s40
      %s44 = sphi 0, %s43
      %s60 = sphi 0, %s44
      %s64 = sphi 0, %s64
      %s66 = sphi 0, %s64
      %s67 = sphi 0, %s66
      %s81 = sphi 0, %s67
      %s85 = sphi 0, %s85
      %s87 = sphi 0, %s85
      %s88 = sphi 0, %s87
      %s102 = sphi 0, %s88
      %s106 = sphi 0, %s106
      %s108 = sphi 0, %s106
      %s109 = sphi 0, %s108
      %s123 = sphi 0, %s109
      %s127 = sphi 0, %s127
      %s129 = sphi 0, %s127
      %s130 = sphi 0, %s129
      %s144 = sphi 0, %s130
      %s148 = sphi 0, %s148
      %s150 = sphi 0, %s148
      %s151 = sphi 0, %s150
      %s165 = sphi 0, %s151
      %s169 = sphi 0, %s169
      %s171 = sphi 0, %s169
      %s172 = sphi 0, %s171
      %s186 = sphi 0, %s172
      %s190 = sphi 0, %s190
      %s192 = sphi 0, %s190
      %s193 = sphi 0, %s192
      %s207 = sphi 0, %s193
      %s211 = sphi 0, %s211
      %s213 = sphi 0, %s211
      %s214 = sphi 0, %s213
      %s228 = sphi 0, %s214
      %s232 = sphi 0, %s232
      %s234 = sphi 0, %s232
      %s235 = sphi 0, %s234
      %s249 = sphi 0, %s235
      %s253 = sphi 0, %s253
      %s255 = sphi 0, %s253
      %s256 = sphi 0, %s255
      %s270 = sphi 0, %s256
      %s274 = sphi 0, %s274
      %s276 = sphi 0, %s274
      %s277 = sphi 0, %s276
      %s291 = sphi 0, %s277
      %s295 = sphi 0, %s295
      %s297 = sphi 0, %s295
      %s298 = sphi 0, %s297
      %s312 = sphi 0, %s298
      %s316 = sphi 0, %s316
      %s318 = sphi 0, %s316
      %s319 = sphi 0, %s318
      %s333 = sphi 0, %s319
      %s337 = sphi 0, %s337
      %s339 = sphi 0, %s337
      %s340 = sphi 0, %s339
      %s354 = sphi 0, %s340
      %s360 = sphi 0, %s362
      %s363 = sphi 0, %s360
      %s364 = sphi 0, %s363
      %s380 = sphi 0, %s364
      %s386 = sphi 0, %s388
      %s389 = sphi 0, %s386
      %s390 = sphi 0, %s389
      %s406 = sphi 0, %s390
    $region4: #{tpu_custom_call.1} parent=1 // loop_header_branch
      %33 = sbr.rel (%p31) target = $region8
    $region5: #{tpu_custom_call.1} parent=1 // loop_body
      %s35 = ssub.s32 %s30, 1
      %s36 = ssub.s32 %s30, 2
      %s37 = sadd.s32 %s30, 1
      %s38 = ssub.s32 %s30, %s37
      %p39 = scmp.eq.s32.totalorder %s38, 0
      %s41 = sadd.s32 %s40, 1
      %s42 = scalar_select %p39, %s40, %s41
      %p45 = pneg %p39
      %p46 = scmp.eq.s32.totalorder %s30, 1
      %p47 = por %p45, %p46
      %p48 = scmp.ne.s32.totalorder %s40, %s43
      %p49 = scmp.eq.s32.totalorder %s30, 0
      %p50 = por %p48, %p49
      %p51 = scmp.ne.s32.totalorder %s40, %s43
      %p52 = scmp.eq.s32.totalorder %s35, 1
      %p53 = por %p51, %p52
      %p54 = scmp.ne.s32.totalorder %s43, %s44
      %p55 = scmp.eq.s32.totalorder %s35, 0
      %p56 = por %p54, %p55
      %p57 = scmp.ne.s32.totalorder %s43, %s44
      %p58 = scmp.eq.s32.totalorder %s36, 1
      %p59 = por %p57, %p58
      %p61 = scmp.ne.s32.totalorder %s44, %s60
      %p62 = scmp.eq.s32.totalorder %s36, 0
      %p63 = por %p61, %p62
      %s65 = sadd.s32 %s64, 1
      %p68 = scmp.eq.s32.totalorder %s30, 1
      %p69 = scmp.ne.s32.totalorder %s64, %s66
      %p70 = scmp.eq.s32.totalorder %s30, 0
      %p71 = por %p69, %p70
      %p72 = scmp.ne.s32.totalorder %s64, %s66
      %p73 = scmp.eq.s32.totalorder %s35, 1
      %p74 = por %p72, %p73
      %p75 = scmp.ne.s32.totalorder %s66, %s67
      %p76 = scmp.eq.s32.totalorder %s35, 0
      %p77 = por %p75, %p76
      %p78 = scmp.ne.s32.totalorder %s66, %s67
      %p79 = scmp.eq.s32.totalorder %s36, 1
      %p80 = por %p78, %p79
      %p82 = scmp.ne.s32.totalorder %s67, %s81
      %p83 = scmp.eq.s32.totalorder %s36, 0
      %p84 = por %p82, %p83
      %s86 = sadd.s32 %s85, 1
      %p89 = scmp.eq.s32.totalorder %s30, 1
      %p90 = scmp.ne.s32.totalorder %s85, %s87
      %p91 = scmp.eq.s32.totalorder %s30, 0
      %p92 = por %p90, %p91
      %p93 = scmp.ne.s32.totalorder %s85, %s87
      %p94 = scmp.eq.s32.totalorder %s35, 1
      %p95 = por %p93, %p94
      %p96 = scmp.ne.s32.totalorder %s87, %s88
      %p97 = scmp.eq.s32.totalorder %s35, 0
      %p98 = por %p96, %p97
      %p99 = scmp.ne.s32.totalorder %s87, %s88
      %p100 = scmp.eq.s32.totalorder %s36, 1
      %p101 = por %p99, %p100
      %p103 = scmp.ne.s32.totalorder %s88, %s102
      %p104 = scmp.eq.s32.totalorder %s36, 0
      %p105 = por %p103, %p104
      %s107 = sadd.s32 %s106, 1
      %p110 = scmp.eq.s32.totalorder %s30, 1
      %p111 = scmp.ne.s32.totalorder %s106, %s108
      %p112 = scmp.eq.s32.totalorder %s30, 0
      %p113 = por %p111, %p112
      %p114 = scmp.ne.s32.totalorder %s106, %s108
      %p115 = scmp.eq.s32.totalorder %s35, 1
      %p116 = por %p114, %p115
      %p117 = scmp.ne.s32.totalorder %s108, %s109
      %p118 = scmp.eq.s32.totalorder %s35, 0
      %p119 = por %p117, %p118
      %p120 = scmp.ne.s32.totalorder %s108, %s109
      %p121 = scmp.eq.s32.totalorder %s36, 1
      %p122 = por %p120, %p121
      %p124 = scmp.ne.s32.totalorder %s109, %s123
      %p125 = scmp.eq.s32.totalorder %s36, 0
      %p126 = por %p124, %p125
      %s128 = sadd.s32 %s127, 1
      %p131 = scmp.eq.s32.totalorder %s30, 1
      %p132 = scmp.ne.s32.totalorder %s127, %s129
      %p133 = scmp.eq.s32.totalorder %s30, 0
      %p134 = por %p132, %p133
      %p135 = scmp.ne.s32.totalorder %s127, %s129
      %p136 = scmp.eq.s32.totalorder %s35, 1
      %p137 = por %p135, %p136
      %p138 = scmp.ne.s32.totalorder %s129, %s130
      %p139 = scmp.eq.s32.totalorder %s35, 0
      %p140 = por %p138, %p139
      %p141 = scmp.ne.s32.totalorder %s129, %s130
      %p142 = scmp.eq.s32.totalorder %s36, 1
      %p143 = por %p141, %p142
      %p145 = scmp.ne.s32.totalorder %s130, %s144
      %p146 = scmp.eq.s32.totalorder %s36, 0
      %p147 = por %p145, %p146
      %s149 = sadd.s32 %s148, 1
      %p152 = scmp.eq.s32.totalorder %s30, 1
      %p153 = scmp.ne.s32.totalorder %s148, %s150
      %p154 = scmp.eq.s32.totalorder %s30, 0
      %p155 = por %p153, %p154
      %p156 = scmp.ne.s32.totalorder %s148, %s150
      %p157 = scmp.eq.s32.totalorder %s35, 1
      %p158 = por %p156, %p157
      %p159 = scmp.ne.s32.totalorder %s150, %s151
      %p160 = scmp.eq.s32.totalorder %s35, 0
      %p161 = por %p159, %p160
      %p162 = scmp.ne.s32.totalorder %s150, %s151
      %p163 = scmp.eq.s32.totalorder %s36, 1
      %p164 = por %p162, %p163
      %p166 = scmp.ne.s32.totalorder %s151, %s165
      %p167 = scmp.eq.s32.totalorder %s36, 0
      %p168 = por %p166, %p167
      %s170 = sadd.s32 %s169, 1
      %p173 = scmp.eq.s32.totalorder %s30, 1
      %p174 = scmp.ne.s32.totalorder %s169, %s171
      %p175 = scmp.eq.s32.totalorder %s30, 0
      %p176 = por %p174, %p175
      %p177 = scmp.ne.s32.totalorder %s169, %s171
      %p178 = scmp.eq.s32.totalorder %s35, 1
      %p179 = por %p177, %p178
      %p180 = scmp.ne.s32.totalorder %s171, %s172
      %p181 = scmp.eq.s32.totalorder %s35, 0
      %p182 = por %p180, %p181
      %p183 = scmp.ne.s32.totalorder %s171, %s172
      %p184 = scmp.eq.s32.totalorder %s36, 1
      %p185 = por %p183, %p184
      %p187 = scmp.ne.s32.totalorder %s172, %s186
      %p188 = scmp.eq.s32.totalorder %s36, 0
      %p189 = por %p187, %p188
      %s191 = sadd.s32 %s190, 1
      %p194 = scmp.eq.s32.totalorder %s30, 1
      %p195 = scmp.ne.s32.totalorder %s190, %s192
      %p196 = scmp.eq.s32.totalorder %s30, 0
      %p197 = por %p195, %p196
      %p198 = scmp.ne.s32.totalorder %s190, %s192
      %p199 = scmp.eq.s32.totalorder %s35, 1
      %p200 = por %p198, %p199
      %p201 = scmp.ne.s32.totalorder %s192, %s193
      %p202 = scmp.eq.s32.totalorder %s35, 0
      %p203 = por %p201, %p202
      %p204 = scmp.ne.s32.totalorder %s192, %s193
      %p205 = scmp.eq.s32.totalorder %s36, 1
      %p206 = por %p204, %p205
      %p208 = scmp.ne.s32.totalorder %s193, %s207
      %p209 = scmp.eq.s32.totalorder %s36, 0
      %p210 = por %p208, %p209
      %s212 = sadd.s32 %s211, 1
      %p215 = scmp.eq.s32.totalorder %s30, 1
      %p216 = scmp.ne.s32.totalorder %s211, %s213
      %p217 = scmp.eq.s32.totalorder %s30, 0
      %p218 = por %p216, %p217
      %p219 = scmp.ne.s32.totalorder %s211, %s213
      %p220 = scmp.eq.s32.totalorder %s35, 1
      %p221 = por %p219, %p220
      %p222 = scmp.ne.s32.totalorder %s213, %s214
      %p223 = scmp.eq.s32.totalorder %s35, 0
      %p224 = por %p222, %p223
      %p225 = scmp.ne.s32.totalorder %s213, %s214
      %p226 = scmp.eq.s32.totalorder %s36, 1
      %p227 = por %p225, %p226
      %p229 = scmp.ne.s32.totalorder %s214, %s228
      %p230 = scmp.eq.s32.totalorder %s36, 0
      %p231 = por %p229, %p230
      %s233 = sadd.s32 %s232, 1
      %p236 = scmp.eq.s32.totalorder %s30, 1
      %p237 = scmp.ne.s32.totalorder %s232, %s234
      %p238 = scmp.eq.s32.totalorder %s30, 0
      %p239 = por %p237, %p238
      %p240 = scmp.ne.s32.totalorder %s232, %s234
      %p241 = scmp.eq.s32.totalorder %s35, 1
      %p242 = por %p240, %p241
      %p243 = scmp.ne.s32.totalorder %s234, %s235
      %p244 = scmp.eq.s32.totalorder %s35, 0
      %p245 = por %p243, %p244
      %p246 = scmp.ne.s32.totalorder %s234, %s235
      %p247 = scmp.eq.s32.totalorder %s36, 1
      %p248 = por %p246, %p247
      %p250 = scmp.ne.s32.totalorder %s235, %s249
      %p251 = scmp.eq.s32.totalorder %s36, 0
      %p252 = por %p250, %p251
      %s254 = sadd.s32 %s253, 1
      %p257 = scmp.eq.s32.totalorder %s30, 1
      %p258 = scmp.ne.s32.totalorder %s253, %s255
      %p259 = scmp.eq.s32.totalorder %s30, 0
      %p260 = por %p258, %p259
      %p261 = scmp.ne.s32.totalorder %s253, %s255
      %p262 = scmp.eq.s32.totalorder %s35, 1
      %p263 = por %p261, %p262
      %p264 = scmp.ne.s32.totalorder %s255, %s256
      %p265 = scmp.eq.s32.totalorder %s35, 0
      %p266 = por %p264, %p265
      %p267 = scmp.ne.s32.totalorder %s255, %s256
      %p268 = scmp.eq.s32.totalorder %s36, 1
      %p269 = por %p267, %p268
      %p271 = scmp.ne.s32.totalorder %s256, %s270
      %p272 = scmp.eq.s32.totalorder %s36, 0
      %p273 = por %p271, %p272
      %s275 = sadd.s32 %s274, 1
      %p278 = scmp.eq.s32.totalorder %s30, 1
      %p279 = scmp.ne.s32.totalorder %s274, %s276
      %p280 = scmp.eq.s32.totalorder %s30, 0
      %p281 = por %p279, %p280
      %p282 = scmp.ne.s32.totalorder %s274, %s276
      %p283 = scmp.eq.s32.totalorder %s35, 1
      %p284 = por %p282, %p283
      %p285 = scmp.ne.s32.totalorder %s276, %s277
      %p286 = scmp.eq.s32.totalorder %s35, 0
      %p287 = por %p285, %p286
      %p288 = scmp.ne.s32.totalorder %s276, %s277
      %p289 = scmp.eq.s32.totalorder %s36, 1
      %p290 = por %p288, %p289
      %p292 = scmp.ne.s32.totalorder %s277, %s291
      %p293 = scmp.eq.s32.totalorder %s36, 0
      %p294 = por %p292, %p293
      %s296 = sadd.s32 %s295, 1
      %p299 = scmp.eq.s32.totalorder %s30, 1
      %p300 = scmp.ne.s32.totalorder %s295, %s297
      %p301 = scmp.eq.s32.totalorder %s30, 0
      %p302 = por %p300, %p301
      %p303 = scmp.ne.s32.totalorder %s295, %s297
      %p304 = scmp.eq.s32.totalorder %s35, 1
      %p305 = por %p303, %p304
      %p306 = scmp.ne.s32.totalorder %s297, %s298
      %p307 = scmp.eq.s32.totalorder %s35, 0
      %p308 = por %p306, %p307
      %p309 = scmp.ne.s32.totalorder %s297, %s298
      %p310 = scmp.eq.s32.totalorder %s36, 1
      %p311 = por %p309, %p310
      %p313 = scmp.ne.s32.totalorder %s298, %s312
      %p314 = scmp.eq.s32.totalorder %s36, 0
      %p315 = por %p313, %p314
      %s317 = sadd.s32 %s316, 1
      %p320 = scmp.eq.s32.totalorder %s30, 1
      %p321 = scmp.ne.s32.totalorder %s316, %s318
      %p322 = scmp.eq.s32.totalorder %s30, 0
      %p323 = por %p321, %p322
      %p324 = scmp.ne.s32.totalorder %s316, %s318
      %p325 = scmp.eq.s32.totalorder %s35, 1
      %p326 = por %p324, %p325
      %p327 = scmp.ne.s32.totalorder %s318, %s319
      %p328 = scmp.eq.s32.totalorder %s35, 0
      %p329 = por %p327, %p328
      %p330 = scmp.ne.s32.totalorder %s318, %s319
      %p331 = scmp.eq.s32.totalorder %s36, 1
      %p332 = por %p330, %p331
      %p334 = scmp.ne.s32.totalorder %s319, %s333
      %p335 = scmp.eq.s32.totalorder %s36, 0
      %p336 = por %p334, %p335
      %s338 = sadd.s32 %s337, 1
      %p341 = scmp.eq.s32.totalorder %s30, 1
      %p342 = scmp.ne.s32.totalorder %s337, %s339
      %p343 = scmp.eq.s32.totalorder %s30, 0
      %p344 = por %p342, %p343
      %p345 = scmp.ne.s32.totalorder %s337, %s339
      %p346 = scmp.eq.s32.totalorder %s35, 1
      %p347 = por %p345, %p346
      %p348 = scmp.ne.s32.totalorder %s339, %s340
      %p349 = scmp.eq.s32.totalorder %s35, 0
      %p350 = por %p348, %p349
      %p351 = scmp.ne.s32.totalorder %s339, %s340
      %p352 = scmp.eq.s32.totalorder %s36, 1
      %p353 = por %p351, %p352
      %p355 = scmp.ne.s32.totalorder %s340, %s354
      %p356 = scmp.eq.s32.totalorder %s36, 0
      %p357 = por %p355, %p356
      %s358 = ssub.s32 %s30, %s37
      %p359 = scmp.eq.s32.totalorder %s358, 0
      %s361 = sadd.s32 %s360, 1
      %s362 = scalar_select %p359, %s360, %s361
      %p365 = pneg %p359
      %p366 = scmp.eq.s32.totalorder %s30, 1
      %p367 = por %p365, %p366
      %p368 = scmp.ne.s32.totalorder %s360, %s363
      %p369 = scmp.eq.s32.totalorder %s30, 0
      %p370 = por %p368, %p369
      %p371 = scmp.ne.s32.totalorder %s360, %s363
      %p372 = scmp.eq.s32.totalorder %s35, 1
      %p373 = por %p371, %p372
      %p374 = scmp.ne.s32.totalorder %s363, %s364
      %p375 = scmp.eq.s32.totalorder %s35, 0
      %p376 = por %p374, %p375
      %p377 = scmp.ne.s32.totalorder %s363, %s364
      %p378 = scmp.eq.s32.totalorder %s36, 1
      %p379 = por %p377, %p378
      %p381 = scmp.ne.s32.totalorder %s364, %s380
      %p382 = scmp.eq.s32.totalorder %s36, 0
      %p383 = por %p381, %p382
      %s384 = ssub.s32 %s30, %s37
      %p385 = scmp.eq.s32.totalorder %s384, 0
      %s387 = sadd.s32 %s386, 1
      %s388 = scalar_select %p385, %s386, %s387
      %p391 = pneg %p385
      %p392 = scmp.eq.s32.totalorder %s30, 1
      %p393 = por %p391, %p392
      %p394 = scmp.ne.s32.totalorder %s386, %s389
      %p395 = scmp.eq.s32.totalorder %s30, 0
      %p396 = por %p394, %p395
      %p397 = scmp.ne.s32.totalorder %s386, %s389
      %p398 = scmp.eq.s32.totalorder %s35, 1
      %p399 = por %p397, %p398
      %p400 = scmp.ne.s32.totalorder %s389, %s390
      %p401 = scmp.eq.s32.totalorder %s35, 0
      %p402 = por %p400, %p401
      %p403 = scmp.ne.s32.totalorder %s389, %s390
      %p404 = scmp.eq.s32.totalorder %s36, 1
      %p405 = por %p403, %p404
      %p407 = scmp.ne.s32.totalorder %s390, %s406
      %p408 = scmp.eq.s32.totalorder %s36, 0
      %p409 = por %p407, %p408
      %p410 = scmp.le.s32.totalorder 1, %s30
      %p411 = scmp.lt.s32.totalorder %s30, 3
      %p412 = pnand %p410, %p411
      %p413 = pneg %p412
      // Predicated region
      $region9: #{tpu_custom_call.1} parent=5 // pred_check
        _
      $region10: #{tpu_custom_call.1} parent=5 // pred_check_branch
        %415 = sbr.rel (%p412) target = $region12
      $region11: #{tpu_custom_call.1} parent=5 // pred_region
        %s416 = ssub.s32 %s30, 1
        // Predicated region
        $region13: #{tpu_custom_call.1} parent=11 // pred_check
          %p417 = pneg %p77
        $region14: #{tpu_custom_call.1} parent=11 // pred_check_branch
          %419 = sbr.rel (%p417) target = $region16
        $region15: #{tpu_custom_call.1} parent=11 // pred_region
          %s421 = ssub.s32 128, 128
          %422 = vsyncadd [#allocation3], %s421
          %s424 = sshll.u32 [#allocation2], 4
          %s425 = int_to_ptr.vmem [resolvable:$true] %s424
          %427 = dma.hbm_to_vmem [thread:$0]  %s1, 128, %s425, [#allocation3]
        $region16: #{tpu_custom_call.1} parent=11 // pred_fallthru
          _
        // Predicated region
        $region17: #{tpu_custom_call.1} parent=11 // pred_check
          %p428 = pneg %p98
        $region18: #{tpu_custom_call.1} parent=11 // pred_check_branch
          %430 = sbr.rel (%p428) target = $region20
        $region19: #{tpu_custom_call.1} parent=11 // pred_region
          _
        $region20: #{tpu_custom_call.1} parent=11 // pred_fallthru
          _
        // Predicated region
        $region21: #{tpu_custom_call.1} parent=11 // pred_check
          %p431 = pneg %p119
        $region22: #{tpu_custom_call.1} parent=11 // pred_check_branch
          %433 = sbr.rel (%p431) target = $region24
        $region23: #{tpu_custom_call.1} parent=11 // pred_region
          _
        $region24: #{tpu_custom_call.1} parent=11 // pred_fallthru
          _
        // Predicated region
        $region25: #{tpu_custom_call.1} parent=11 // pred_check
          %p434 = pneg %p140
        $region26: #{tpu_custom_call.1} parent=11 // pred_check_branch
          %436 = sbr.rel (%p434) target = $region28
        $region27: #{tpu_custom_call.1} parent=11 // pred_region
          %s438 = ssub.s32 16, 16
          %439 = vsyncadd [#allocation6], %s438
          %s441 = sshll.u32 [#allocation5], 4
          %s442 = int_to_ptr.vmem [resolvable:$true] %s441
          %444 = dma.hbm_to_vmem [thread:$0]  %s4, 16, %s442, [#allocation6]
        $region28: #{tpu_custom_call.1} parent=11 // pred_fallthru
          _
        // Predicated region
        $region29: #{tpu_custom_call.1} parent=11 // pred_check
          %p445 = pneg %p161
        $region30: #{tpu_custom_call.1} parent=11 // pred_check_branch
          %447 = sbr.rel (%p445) target = $region32
        $region31: #{tpu_custom_call.1} parent=11 // pred_region
          _
        $region32: #{tpu_custom_call.1} parent=11 // pred_fallthru
          _
        // Predicated region
        $region33: #{tpu_custom_call.1} parent=11 // pred_check
          %p448 = pneg %p182
        $region34: #{tpu_custom_call.1} parent=11 // pred_check_branch
          %450 = sbr.rel (%p448) target = $region36
        $region35: #{tpu_custom_call.1} parent=11 // pred_region
          %s452 = ssub.s32 16, 16
          %453 = vsyncadd [#allocation6], %s452
          %s455 = sshll.u32 [#allocation7], 4
          %s456 = int_to_ptr.vmem [resolvable:$true] %s455
          %458 = dma.hbm_to_vmem [thread:$0]  %s6, 16, %s456, [#allocation6]
        $region36: #{tpu_custom_call.1} parent=11 // pred_fallthru
          _
        // Predicated region
        $region37: #{tpu_custom_call.1} parent=11 // pred_check
          %p459 = pneg %p203
        $region38: #{tpu_custom_call.1} parent=11 // pred_check_branch
          %461 = sbr.rel (%p459) target = $region40
        $region39: #{tpu_custom_call.1} parent=11 // pred_region
          %s463 = ssub.s32 896, 896
          %464 = vsyncadd [#allocation9], %s463
          %s465 = sshll.u32 [#allocation8], 4
          %s466 = int_to_ptr.vmem [resolvable:$true] %s465
          %471 = dma.hbm_to_vmem [thread:$0]  %s7, 896, %s466, [#allocation9], 128, 128, 8
        $region40: #{tpu_custom_call.1} parent=11 // pred_fallthru
          _
        // Predicated region
        $region41: #{tpu_custom_call.1} parent=11 // pred_check
          %p472 = pneg %p224
        $region42: #{tpu_custom_call.1} parent=11 // pred_check_branch
          %474 = sbr.rel (%p472) target = $region44
        $region43: #{tpu_custom_call.1} parent=11 // pred_region
          %s476 = ssub.s32 16, 16
          %477 = vsyncadd [#allocation9], %s476
          %s479 = sshll.u32 [#allocation10], 4
          %s480 = int_to_ptr.vmem [resolvable:$true] %s479
          %482 = dma.hbm_to_vmem [thread:$0]  %s8, 16, %s480, [#allocation9]
        $region44: #{tpu_custom_call.1} parent=11 // pred_fallthru
          _
        // Predicated region
        $region45: #{tpu_custom_call.1} parent=11 // pred_check
          %p483 = pneg %p245
        $region46: #{tpu_custom_call.1} parent=11 // pred_check_branch
          %485 = sbr.rel (%p483) target = $region48
        $region47: #{tpu_custom_call.1} parent=11 // pred_region
          _
        $region48: #{tpu_custom_call.1} parent=11 // pred_fallthru
          _
        // Predicated region
        $region49: #{tpu_custom_call.1} parent=11 // pred_check
          %p486 = pneg %p266
        $region50: #{tpu_custom_call.1} parent=11 // pred_check_branch
          %488 = sbr.rel (%p486) target = $region52
        $region51: #{tpu_custom_call.1} parent=11 // pred_region
          %s490 = ssub.s32 16, 16
          %491 = vsyncadd [#allocation12], %s490
          %s493 = sshll.u32 [#allocation11], 4
          %s494 = int_to_ptr.vmem [resolvable:$true] %s493
          %496 = dma.hbm_to_vmem [thread:$0]  %s10, 16, %s494, [#allocation12]
        $region52: #{tpu_custom_call.1} parent=11 // pred_fallthru
          _
        // Predicated region
        $region53: #{tpu_custom_call.1} parent=11 // pred_check
          %p497 = pneg %p287
        $region54: #{tpu_custom_call.1} parent=11 // pred_check_branch
          %499 = sbr.rel (%p497) target = $region56
        $region55: #{tpu_custom_call.1} parent=11 // pred_region
          %s501 = ssub.s32 896, 896
          %502 = vsyncadd [#allocation12], %s501
          %s503 = sshll.u32 [#allocation13], 4
          %s504 = int_to_ptr.vmem [resolvable:$true] %s503
          %509 = dma.hbm_to_vmem [thread:$0]  %s11, 896, %s504, [#allocation12], 128, 128, 8
        $region56: #{tpu_custom_call.1} parent=11 // pred_fallthru
          _
        // Predicated region
        $region57: #{tpu_custom_call.1} parent=11 // pred_check
          %p510 = pneg %p308
        $region58: #{tpu_custom_call.1} parent=11 // pred_check_branch
          %512 = sbr.rel (%p510) target = $region60
        $region59: #{tpu_custom_call.1} parent=11 // pred_region
          _
        $region60: #{tpu_custom_call.1} parent=11 // pred_fallthru
          _
        // Predicated region
        $region61: #{tpu_custom_call.1} parent=11 // pred_check
          %p513 = pneg %p329
        $region62: #{tpu_custom_call.1} parent=11 // pred_check_branch
          %515 = sbr.rel (%p513) target = $region64
        $region63: #{tpu_custom_call.1} parent=11 // pred_region
          _
        $region64: #{tpu_custom_call.1} parent=11 // pred_fallthru
          _
        // Predicated region
        $region65: #{tpu_custom_call.1} parent=11 // pred_check
          %p516 = pneg %p350
        $region66: #{tpu_custom_call.1} parent=11 // pred_check_branch
          %518 = sbr.rel (%p516) target = $region68
        $region67: #{tpu_custom_call.1} parent=11 // pred_region
          _
        $region68: #{tpu_custom_call.1} parent=11 // pred_fallthru
          _
      $region12: #{tpu_custom_call.1} parent=5 // pred_fallthru
        _
      %p519 = scmp.lt.s32.totalorder %s30, 2
      // Predicated region
      $region69: #{tpu_custom_call.1} parent=5 // pred_check
        %p520 = pneg %p519
      $region70: #{tpu_custom_call.1} parent=5 // pred_check_branch
        %522 = sbr.rel (%p520) target = $region72
      $region71: #{tpu_custom_call.1} parent=5 // pred_region
        // Predicated region
        $region73: #{tpu_custom_call.1} parent=71 // pred_check
          %p523 = pneg %p50
        $region74: #{tpu_custom_call.1} parent=71 // pred_check_branch
          %525 = sbr.rel (%p523) target = $region76
        $region75: #{tpu_custom_call.1} parent=71 // pred_region
          %s526 = smul.u32 4, %s30
          %p527 = scmp.lt.s32.totalorder %s526, 7
          %s528 = scalar_select %p527, %s526, 7
          %s529 = smul.addr %s528, 8
          %s530 = scalar_lea.vmem %s0, %s529
          %s531 = smul.u32 4, %s30
        $region76: #{tpu_custom_call.1} parent=71 // pred_fallthru
          _
      $region72: #{tpu_custom_call.1} parent=5 // pred_fallthru
        _
      %p532 = scmp.le.s32.totalorder 1, %s30
      %p533 = scmp.lt.s32.totalorder %s30, 3
      %p534 = pnand %p532, %p533
      %p535 = pneg %p534
      // Predicated region
      $region77: #{tpu_custom_call.1} parent=5 // pred_check
        _
      $region78: #{tpu_custom_call.1} parent=5 // pred_check_branch
        %537 = sbr.rel (%p534) target = $region80
      $region79: #{tpu_custom_call.1} parent=5 // pred_region
        %s538 = ssub.s32 %s30, 1
        // Predicated region
        $region81: #{tpu_custom_call.1} parent=79 // pred_check
          %p539 = pneg %p77
        $region82: #{tpu_custom_call.1} parent=79 // pred_check_branch
          %541 = sbr.rel (%p539) target = $region84
        $region83: #{tpu_custom_call.1} parent=79 // pred_region
          %542 = dma.done [#allocation3], 128
        $region84: #{tpu_custom_call.1} parent=79 // pred_fallthru
          _
        // Predicated region
        $region85: #{tpu_custom_call.1} parent=79 // pred_check
          %p543 = pneg %p140
        $region86: #{tpu_custom_call.1} parent=79 // pred_check_branch
          %545 = sbr.rel (%p543) target = $region88
        $region87: #{tpu_custom_call.1} parent=79 // pred_region
          %546 = dma.done [#allocation6], 16
        $region88: #{tpu_custom_call.1} parent=79 // pred_fallthru
          _
        // Predicated region
        $region89: #{tpu_custom_call.1} parent=79 // pred_check
          %p547 = pneg %p182
        $region90: #{tpu_custom_call.1} parent=79 // pred_check_branch
          %549 = sbr.rel (%p547) target = $region92
        $region91: #{tpu_custom_call.1} parent=79 // pred_region
          %550 = dma.done [#allocation6], 16
        $region92: #{tpu_custom_call.1} parent=79 // pred_fallthru
          _
        // Predicated region
        $region93: #{tpu_custom_call.1} parent=79 // pred_check
          %p551 = pneg %p203
        $region94: #{tpu_custom_call.1} parent=79 // pred_check_branch
          %553 = sbr.rel (%p551) target = $region96
        $region95: #{tpu_custom_call.1} parent=79 // pred_region
          %554 = dma.done [#allocation9], 896
        $region96: #{tpu_custom_call.1} parent=79 // pred_fallthru
          _
        // Predicated region
        $region97: #{tpu_custom_call.1} parent=79 // pred_check
          %p555 = pneg %p224
        $region98: #{tpu_custom_call.1} parent=79 // pred_check_branch
          %557 = sbr.rel (%p555) target = $region100
        $region99: #{tpu_custom_call.1} parent=79 // pred_region
          %558 = dma.done [#allocation9], 16
        $region100: #{tpu_custom_call.1} parent=79 // pred_fallthru
          _
        // Predicated region
        $region101: #{tpu_custom_call.1} parent=79 // pred_check
          %p559 = pneg %p266
        $region102: #{tpu_custom_call.1} parent=79 // pred_check_branch
          %561 = sbr.rel (%p559) target = $region104
        $region103: #{tpu_custom_call.1} parent=79 // pred_region
          %562 = dma.done [#allocation12], 16
        $region104: #{tpu_custom_call.1} parent=79 // pred_fallthru
          _
        // Predicated region
        $region105: #{tpu_custom_call.1} parent=79 // pred_check
          %p563 = pneg %p287
        $region106: #{tpu_custom_call.1} parent=79 // pred_check_branch
          %565 = sbr.rel (%p563) target = $region108
        $region107: #{tpu_custom_call.1} parent=79 // pred_region
          %566 = dma.done [#allocation12], 896
        $region108: #{tpu_custom_call.1} parent=79 // pred_fallthru
          _
        %s567 = smul.u32 4, %s35
        %p568 = scmp.lt.s32.totalorder %s567, 7
        %s569 = scalar_select %p568, %s567, 7
        %s570 = smul.addr %s569, 8
        %s571 = scalar_lea.vmem %s0, %s570
        %p572 = pneg %p56
        %p573 = pneg %p53
        %p574 = pneg %p77
        %p575 = pneg %p74
        %p576 = pneg %p98
        %p577 = pneg %p95
        %p578 = pneg %p119
        %p579 = pneg %p116
        %p580 = pneg %p140
        %p581 = pneg %p137
        %p582 = pneg %p161
        %p583 = pneg %p158
        %p584 = pneg %p182
        %p585 = pneg %p179
        %p586 = pneg %p203
        %p587 = pneg %p200
        %p588 = pneg %p224
        %p589 = pneg %p221
        %p590 = pneg %p245
        %p591 = pneg %p242
        %p592 = pneg %p266
        %p593 = pneg %p263
        %p594 = pneg %p287
        %p595 = pneg %p284
        %p596 = pneg %p308
        %p597 = pneg %p305
        %p598 = pneg %p329
        %p599 = pneg %p326
        %p600 = pneg %p350
        %p601 = pneg %p347
        %p602 = pneg %p376
        %p603 = pneg %p373
        %s604 = sand.u32 %s363, 1
        %s605 = scalar_lea.sflag [#allocation4], %s604
        %s606 = sand.u32 %s363, 1
        %s607 = smul.addr %s606, 96
        %s608 = scalar_lea.vmem [#allocation14], %s607
        %p609 = pneg %p402
        %p610 = pneg %p399
        %s611 = smul.u32 4, %s35
        %p612 = scmp.lt.s32.totalorder %s611, 7
        %s613 = scalar_select %p612, %s611, 7
        %s614 = smul.addr %s613, 8
        %s615 = scalar_lea.vmem %s16, %s614
        %s616 = smul.u32 4, %s35
        %p617 = scmp.lt.s32.totalorder %s616, 7
        %s618 = scalar_select %p617, %s616, 7
        %s619 = smul.addr %s618, 8
        %s620 = scalar_lea.vmem %s0, %s619
        %s621 = smul.u32 4, %s35
        %s622 = smul.u32 4, %s35
        %s623 = smul.u32 4, %s35
        %p624 = scmp.lt.s32.totalorder %s623, 7
        %s625 = scalar_select %p624, %s623, 7
        %s626 = smul.addr %s625, 8
        %s627 = scalar_lea.vmem %s16, %s626
        %s628 = smul.u32 4, %s35
        %v629 = vld [vmem:[%s620] sm:$0xff]
        %v630 = vld [vmem:[%s620 + $0x8] sm:$0xff]
        %v631 = vld [vmem:[%s620 + $0x10] sm:$0xff]
        %v632 = vld [vmem:[%s620 + $0x18] sm:$0xff]
        %v633 = vld [vmem:[#allocation2] sm:$0x1f]
        %v634 = vld [vmem:[%s2] sm:$0x1]
        %v636 = vlaneseq
        %v637 = vshrl.u32 %v636, 7
        %v638 = vsub.s32 0, %v637
        %v639 = vrot.slane %v634, %v638
        %vm641 = vcmask 39936
        %v643 = vsel %vm641, %v629, 0
        %v646 = vsel %vm641, %v630, 0
        %v649 = vsel %vm641, %v631, 0
        %v652 = vsel %vm641, %v632, 0
        %vm654 = vcmask 1044480
        %v656 = vsel %vm654, %v633, 0
        %658 = vmatprep.subr.mxu0 0.0
        %659 = vmatpush1.msra.mxu0 %v656
        %660 = vmatprep.subr.mxu0 0.0
        %661 = vmatpush1.msra.mxu0 0.0
        %662 = vmatprep.subr.mxu0 0.0
        %663 = vmatpush1.msra.mxu0 0.0
        %664 = vmatprep.subr.mxu0 0.0
        %665 = vmatpush1.msra.mxu0 0.0
        %666 = vmatprep.subr.mxu0 0.0
        %667 = vmatpush1.msra.mxu0 0.0
        %668 = vmatprep.subr.mxu0 0.0
        %669 = vmatpush1.msra.mxu0 0.0
        %670 = vmatprep.subr.mxu0 0.0
        %671 = vmatpush1.msra.mxu0 0.0
        %672 = vmatprep.subr.mxu0 0.0
        %673 = vmatpush1.msra.mxu0 0.0
        %674 = vmatprep.subr.mxu0 0.0
        %675 = vmatpush1.msra.mxu0 0.0
        %676 = vmatprep.subr.mxu0 0.0
        %677 = vmatpush1.msra.mxu0 0.0
        %678 = vmatprep.subr.mxu0 0.0
        %679 = vmatpush1.msra.mxu0 0.0
        %680 = vmatprep.subr.mxu0 0.0
        %681 = vmatpush1.msra.mxu0 0.0
        %682 = vmatprep.subr.mxu0 0.0
        %683 = vmatpush1.msra.mxu0 0.0
        %684 = vmatprep.subr.mxu0 0.0
        %685 = vmatpush1.msra.mxu0 0.0
        %686 = vmatprep.subr.mxu0 0.0
        %687 = vmatpush1.msra.mxu0 0.0
        %688 = vmatprep.subr.mxu0 0.0
        %689 = vmatpush1.msra.mxu0 0.0
        %690 = vmatprep.subr.mxu0 0.0
        %691 = vmatpush1.msra.mxu0 0.0
        %692 = vmatprep.subr.mxu0 0.0
        %693 = vmatpush1.msra.mxu0 0.0
        %694 = vmatprep.subr.mxu0 0.0
        %695 = vmatpush1.msra.mxu0 0.0
        %696 = vmatprep.subr.mxu0 0.0
        %697 = vmatpush1.msra.mxu0 0.0
        %698 = vmatprep.subr.mxu0 0.0
        %699 = vmatpush1.msra.mxu0 0.0
        %700 = vmatprep.subr.mxu0 0.0
        %701 = vmatpush1.msra.mxu0 0.0
        %702 = vmatprep.subr.mxu0 0.0
        %703 = vmatpush1.msra.mxu0 0.0
        %704 = vmatprep.subr.mxu0 0.0
        %705 = vmatpush1.msra.mxu0 0.0
        %706 = vmatprep.subr.mxu0 0.0
        %707 = vmatpush1.msra.mxu0 0.0
        %708 = vmatprep.subr.mxu0 0.0
        %709 = vmatpush1.msra.mxu0 0.0
        %710 = vmatprep.subr.mxu0 0.0
        %711 = vmatpush1.msra.mxu0 0.0
        %712 = vmatprep.subr.mxu0 0.0
        %713 = vmatpush1.msra.mxu0 0.0
        %714 = vmatprep.subr.mxu0 0.0
        %715 = vmatpush1.msra.mxu0 0.0
        %716 = vmatprep.subr.mxu0 0.0
        %717 = vmatpush1.msra.mxu0 0.0
        %718 = vmatprep.subr.mxu0 0.0
        %719 = vmatpush1.msra.mxu0 0.0
        %720 = vmatprep.subr.mxu0 0.0
        %721 = vmatpush1.msra.mxu0 0.0
        %722 = vmatprep.mubr.f32.mxu0 0.0
        %723 = vmatmul.mubr.f32.gmra.mrb[0].mxu0 %v643
        %v724 = vpop.f32.mrb[0].mxu0
        %v725 = vadd.f32 %v639, %v724
        %v726 = vpop.f32.mrb[0].mxu0
        %727 = vmatprep.mubr.f32.mxu0 0.0
        %728 = vmatmul.mubr.f32.gmra.mrb[0].mxu0 %v646
        %v729 = vpop.f32.mrb[0].mxu0
        %v730 = vadd.f32 %v639, %v729
        %v731 = vpop.f32.mrb[0].mxu0
        %732 = vmatprep.mubr.f32.mxu0 0.0
        %733 = vmatmul.mubr.f32.gmra.mrb[0].mxu0 %v649
        %v734 = vpop.f32.mrb[0].mxu0
        %v735 = vadd.f32 %v639, %v734
        %v736 = vpop.f32.mrb[0].mxu0
        %737 = vmatprep.mubr.f32.mxu0 0.0
        %738 = vmatmul.mubr.f32.gmra.mrb[0].mxu0 %v652
        %v739 = vpop.f32.mrb[0].mxu0
        %v740 = vadd.f32 %v639, %v739
        %v741 = vpop.f32.mrb[0].mxu0
        %742 = vdwg.mxu0
        %v743 = vmax.f32 %v725, 0.0
        %v744 = vmax.f32 %v730, 0.0
        %v745 = vmax.f32 %v735, 0.0
        %v746 = vmax.f32 %v740, 0.0
        %v747 = vld [vmem:[%s3] sm:$0xff]
        %v748 = vld [vmem:[%s3 + $0x8] sm:$0xff]
        %v749 = vld [vmem:[%s3 + $0x10] sm:$0xff]
        %v750 = vld [vmem:[%s3 + $0x18] sm:$0xff]
        %v751 = vld [vmem:[%s3 + $0x20] sm:$0xff]
        %v752 = vld [vmem:[%s3 + $0x28] sm:$0xff]
        %v753 = vld [vmem:[%s3 + $0x30] sm:$0x3]
        %v754 = vld [vmem:[#allocation5] sm:$0x1]
        %v756 = vlaneseq
        %v757 = vshrl.u32 %v756, 7
        %v758 = vsub.s32 0, %v757
        %v759 = vrot.slane %v754, %v758
        %vm761 = vcmask 408576
        %v763 = vsel %vm761, %v743, 0
        %v766 = vsel %vm761, %v744, 0
        %v769 = vsel %vm761, %v745, 0
        %v772 = vsel %vm761, %v746, 0
        %vm774 = vcmask 1041408
        %v776 = vsel %vm774, %v753, 0
        %778 = vmatprep.subr.mxu0 0.0
        %779 = vmatpush1.msra.mxu0 %v747
        %780 = vmatprep.subr.mxu0 0.0
        %781 = vmatpush1.msra.mxu0 %v748
        %782 = vmatprep.subr.mxu0 0.0
        %783 = vmatpush1.msra.mxu0 %v749
        %784 = vmatprep.subr.mxu0 0.0
        %785 = vmatpush1.msra.mxu0 %v750
        %786 = vmatprep.subr.mxu0 0.0
        %787 = vmatpush1.msra.mxu0 %v751
        %788 = vmatprep.subr.mxu0 0.0
        %789 = vmatpush1.msra.mxu0 %v752
        %790 = vmatprep.subr.mxu0 0.0
        %791 = vmatpush1.msra.mxu0 %v776
        %792 = vmatprep.subr.mxu0 0.0
        %793 = vmatpush1.msra.mxu0 0.0
        %794 = vmatprep.subr.mxu0 0.0
        %795 = vmatpush1.msra.mxu0 0.0
        %796 = vmatprep.subr.mxu0 0.0
        %797 = vmatpush1.msra.mxu0 0.0
        %798 = vmatprep.subr.mxu0 0.0
        %799 = vmatpush1.msra.mxu0 0.0
        %800 = vmatprep.subr.mxu0 0.0
        %801 = vmatpush1.msra.mxu0 0.0
        %802 = vmatprep.subr.mxu0 0.0
        %803 = vmatpush1.msra.mxu0 0.0
        %804 = vmatprep.subr.mxu0 0.0
        %805 = vmatpush1.msra.mxu0 0.0
        %806 = vmatprep.subr.mxu0 0.0
        %807 = vmatpush1.msra.mxu0 0.0
        %808 = vmatprep.subr.mxu0 0.0
        %809 = vmatpush1.msra.mxu0 0.0
        %810 = vmatprep.subr.mxu0 0.0
        %811 = vmatpush1.msra.mxu0 0.0
        %812 = vmatprep.subr.mxu0 0.0
        %813 = vmatpush1.msra.mxu0 0.0
        %814 = vmatprep.subr.mxu0 0.0
        %815 = vmatpush1.msra.mxu0 0.0
        %816 = vmatprep.subr.mxu0 0.0
        %817 = vmatpush1.msra.mxu0 0.0
        %818 = vmatprep.subr.mxu0 0.0
        %819 = vmatpush1.msra.mxu0 0.0
        %820 = vmatprep.subr.mxu0 0.0
        %821 = vmatpush1.msra.mxu0 0.0
        %822 = vmatprep.subr.mxu0 0.0
        %823 = vmatpush1.msra.mxu0 0.0
        %824 = vmatprep.subr.mxu0 0.0
        %825 = vmatpush1.msra.mxu0 0.0
        %826 = vmatprep.subr.mxu0 0.0
        %827 = vmatpush1.msra.mxu0 0.0
        %828 = vmatprep.subr.mxu0 0.0
        %829 = vmatpush1.msra.mxu0 0.0
        %830 = vmatprep.subr.mxu0 0.0
        %831 = vmatpush1.msra.mxu0 0.0
        %832 = vmatprep.subr.mxu0 0.0
        %833 = vmatpush1.msra.mxu0 0.0
        %834 = vmatprep.subr.mxu0 0.0
        %835 = vmatpush1.msra.mxu0 0.0
        %836 = vmatprep.subr.mxu0 0.0
        %837 = vmatpush1.msra.mxu0 0.0
        %838 = vmatprep.subr.mxu0 0.0
        %839 = vmatpush1.msra.mxu0 0.0
        %840 = vmatprep.subr.mxu0 0.0
        %841 = vmatpush1.msra.mxu0 0.0
        %842 = vmatprep.mubr.f32.mxu0 0.0
        %843 = vmatmul.mubr.f32.gmra.mrb[0].mxu0 %v763
        %v844 = vpop.f32.mrb[0].mxu0
        %v845 = vadd.f32 %v759, %v844
        %v846 = vpop.f32.mrb[0].mxu0
        %847 = vmatprep.mubr.f32.mxu0 0.0
        %848 = vmatmul.mubr.f32.gmra.mrb[0].mxu0 %v766
        %v849 = vpop.f32.mrb[0].mxu0
        %v850 = vadd.f32 %v759, %v849
        %v851 = vpop.f32.mrb[0].mxu0
        %852 = vmatprep.mubr.f32.mxu0 0.0
        %853 = vmatmul.mubr.f32.gmra.mrb[0].mxu0 %v769
        %v854 = vpop.f32.mrb[0].mxu0
        %v855 = vadd.f32 %v759, %v854
        %v856 = vpop.f32.mrb[0].mxu0
        %857 = vmatprep.mubr.f32.mxu0 0.0
        %858 = vmatmul.mubr.f32.gmra.mrb[0].mxu0 %v772
        %v859 = vpop.f32.mrb[0].mxu0
        %v860 = vadd.f32 %v759, %v859
        %v861 = vpop.f32.mrb[0].mxu0
        %862 = vdwg.mxu0
        %v863 = vmax.f32 %v845, 0.0
        %v864 = vmax.f32 %v850, 0.0
        %v865 = vmax.f32 %v855, 0.0
        %v866 = vmax.f32 %v860, 0.0
        %v867 = vld [vmem:[%s5] sm:$0xff]
        %v868 = vld [vmem:[%s5 + $0x8] sm:$0xff]
        %v869 = vld [vmem:[%s5 + $0x10] sm:$0xff]
        %v870 = vld [vmem:[%s5 + $0x18] sm:$0xff]
        %v871 = vld [vmem:[%s5 + $0x20] sm:$0xff]
        %v872 = vld [vmem:[%s5 + $0x28] sm:$0xff]
        %v873 = vld [vmem:[%s5 + $0x30] sm:$0x3]
        %v874 = vld [vmem:[#allocation7] sm:$0x1]
        %v876 = vlaneseq
        %v877 = vshrl.u32 %v876, 7
        %v878 = vsub.s32 0, %v877
        %v879 = vrot.slane %v874, %v878
        %v882 = vsel %vm761, %v863, 0
        %v885 = vsel %vm761, %v864, 0
        %v888 = vsel %vm761, %v865, 0
        %v891 = vsel %vm761, %v866, 0
        %v894 = vsel %vm774, %v873, 0
        %896 = vmatprep.subr.mxu0 0.0
        %897 = vmatpush1.msra.mxu0 %v867
        %898 = vmatprep.subr.mxu0 0.0
        %899 = vmatpush1.msra.mxu0 %v868
        %900 = vmatprep.subr.mxu0 0.0
        %901 = vmatpush1.msra.mxu0 %v869
        %902 = vmatprep.subr.mxu0 0.0
        %903 = vmatpush1.msra.mxu0 %v870
        %904 = vmatprep.subr.mxu0 0.0
        %905 = vmatpush1.msra.mxu0 %v871
        %906 = vmatprep.subr.mxu0 0.0
        %907 = vmatpush1.msra.mxu0 %v872
        %908 = vmatprep.subr.mxu0 0.0
        %909 = vmatpush1.msra.mxu0 %v894
        %910 = vmatprep.subr.mxu0 0.0
        %911 = vmatpush1.msra.mxu0 0.0
        %912 = vmatprep.subr.mxu0 0.0
        %913 = vmatpush1.msra.mxu0 0.0
        %914 = vmatprep.subr.mxu0 0.0
        %915 = vmatpush1.msra.mxu0 0.0
        %916 = vmatprep.subr.mxu0 0.0
        %917 = vmatpush1.msra.mxu0 0.0
        %918 = vmatprep.subr.mxu0 0.0
        %919 = vmatpush1.msra.mxu0 0.0
        %920 = vmatprep.subr.mxu0 0.0
        %921 = vmatpush1.msra.mxu0 0.0
        %922 = vmatprep.subr.mxu0 0.0
        %923 = vmatpush1.msra.mxu0 0.0
        %924 = vmatprep.subr.mxu0 0.0
        %925 = vmatpush1.msra.mxu0 0.0
        %926 = vmatprep.subr.mxu0 0.0
        %927 = vmatpush1.msra.mxu0 0.0
        %928 = vmatprep.subr.mxu0 0.0
        %929 = vmatpush1.msra.mxu0 0.0
        %930 = vmatprep.subr.mxu0 0.0
        %931 = vmatpush1.msra.mxu0 0.0
        %932 = vmatprep.subr.mxu0 0.0
        %933 = vmatpush1.msra.mxu0 0.0
        %934 = vmatprep.subr.mxu0 0.0
        %935 = vmatpush1.msra.mxu0 0.0
        %936 = vmatprep.subr.mxu0 0.0
        %937 = vmatpush1.msra.mxu0 0.0
        %938 = vmatprep.subr.mxu0 0.0
        %939 = vmatpush1.msra.mxu0 0.0
        %940 = vmatprep.subr.mxu0 0.0
        %941 = vmatpush1.msra.mxu0 0.0
        %942 = vmatprep.subr.mxu0 0.0
        %943 = vmatpush1.msra.mxu0 0.0
        %944 = vmatprep.subr.mxu0 0.0
        %945 = vmatpush1.msra.mxu0 0.0
        %946 = vmatprep.subr.mxu0 0.0
        %947 = vmatpush1.msra.mxu0 0.0
        %948 = vmatprep.subr.mxu0 0.0
        %949 = vmatpush1.msra.mxu0 0.0
        %950 = vmatprep.subr.mxu0 0.0
        %951 = vmatpush1.msra.mxu0 0.0
        %952 = vmatprep.subr.mxu0 0.0
        %953 = vmatpush1.msra.mxu0 0.0
        %954 = vmatprep.subr.mxu0 0.0
        %955 = vmatpush1.msra.mxu0 0.0
        %956 = vmatprep.subr.mxu0 0.0
        %957 = vmatpush1.msra.mxu0 0.0
        %958 = vmatprep.subr.mxu0 0.0
        %959 = vmatpush1.msra.mxu0 0.0
        %960 = vmatprep.mubr.f32.mxu0 0.0
        %961 = vmatmul.mubr.f32.gmra.mrb[0].mxu0 %v882
        %v962 = vpop.f32.mrb[0].mxu0
        %v963 = vadd.f32 %v879, %v962
        %v964 = vpop.f32.mrb[0].mxu0
        %965 = vmatprep.mubr.f32.mxu0 0.0
        %966 = vmatmul.mubr.f32.gmra.mrb[0].mxu0 %v885
        %v967 = vpop.f32.mrb[0].mxu0
        %v968 = vadd.f32 %v879, %v967
        %v969 = vpop.f32.mrb[0].mxu0
        %970 = vmatprep.mubr.f32.mxu0 0.0
        %971 = vmatmul.mubr.f32.gmra.mrb[0].mxu0 %v888
        %v972 = vpop.f32.mrb[0].mxu0
        %v973 = vadd.f32 %v879, %v972
        %v974 = vpop.f32.mrb[0].mxu0
        %975 = vmatprep.mubr.f32.mxu0 0.0
        %976 = vmatmul.mubr.f32.gmra.mrb[0].mxu0 %v891
        %v977 = vpop.f32.mrb[0].mxu0
        %v978 = vadd.f32 %v879, %v977
        %v979 = vpop.f32.mrb[0].mxu0
        %980 = vdwg.mxu0
        %v981 = vmax.f32 %v963, 0.0
        %v982 = vmax.f32 %v968, 0.0
        %v983 = vmax.f32 %v973, 0.0
        %v984 = vmax.f32 %v978, 0.0
        %v985 = vld [vmem:[#allocation8] sm:$0xff]
        %v986 = vld [vmem:[#allocation8 + $0x8] sm:$0xff]
        %v987 = vld [vmem:[#allocation8 + $0x10] sm:$0xff]
        %v988 = vld [vmem:[#allocation8 + $0x18] sm:$0xff]
        %v989 = vld [vmem:[#allocation8 + $0x20] sm:$0xff]
        %v990 = vld [vmem:[#allocation8 + $0x28] sm:$0xff]
        %v991 = vld [vmem:[#allocation8 + $0x30] sm:$0x3]
        %v992 = vld [vmem:[#allocation10] sm:$0x1]
        %v994 = vlaneseq
        %v995 = vshrl.u32 %v994, 7
        %v996 = vsub.s32 0, %v995
        %v997 = vrot.slane %v992, %v996
        %v1000 = vsel %vm761, %v981, 0
        %v1003 = vsel %vm761, %v982, 0
        %v1006 = vsel %vm761, %v983, 0
        %v1009 = vsel %vm761, %v984, 0
        %v1012 = vsel %vm774, %v991, 0
        %1014 = vmatprep.subr.mxu0 0.0
        %1015 = vmatpush1.msra.mxu0 %v985
        %1016 = vmatprep.subr.mxu0 0.0
        %1017 = vmatpush1.msra.mxu0 %v986
        %1018 = vmatprep.subr.mxu0 0.0
        %1019 = vmatpush1.msra.mxu0 %v987
        %1020 = vmatprep.subr.mxu0 0.0
        %1021 = vmatpush1.msra.mxu0 %v988
        %1022 = vmatprep.subr.mxu0 0.0
        %1023 = vmatpush1.msra.mxu0 %v989
        %1024 = vmatprep.subr.mxu0 0.0
        %1025 = vmatpush1.msra.mxu0 %v990
        %1026 = vmatprep.subr.mxu0 0.0
        %1027 = vmatpush1.msra.mxu0 %v1012
        %1028 = vmatprep.subr.mxu0 0.0
        %1029 = vmatpush1.msra.mxu0 0.0
        %1030 = vmatprep.subr.mxu0 0.0
        %1031 = vmatpush1.msra.mxu0 0.0
        %1032 = vmatprep.subr.mxu0 0.0
        %1033 = vmatpush1.msra.mxu0 0.0
        %1034 = vmatprep.subr.mxu0 0.0
        %1035 = vmatpush1.msra.mxu0 0.0
        %1036 = vmatprep.subr.mxu0 0.0
        %1037 = vmatpush1.msra.mxu0 0.0
        %1038 = vmatprep.subr.mxu0 0.0
        %1039 = vmatpush1.msra.mxu0 0.0
        %1040 = vmatprep.subr.mxu0 0.0
        %1041 = vmatpush1.msra.mxu0 0.0
        %1042 = vmatprep.subr.mxu0 0.0
        %1043 = vmatpush1.msra.mxu0 0.0
        %1044 = vmatprep.subr.mxu0 0.0
        %1045 = vmatpush1.msra.mxu0 0.0
        %1046 = vmatprep.subr.mxu0 0.0
        %1047 = vmatpush1.msra.mxu0 0.0
        %1048 = vmatprep.subr.mxu0 0.0
        %1049 = vmatpush1.msra.mxu0 0.0
        %1050 = vmatprep.subr.mxu0 0.0
        %1051 = vmatpush1.msra.mxu0 0.0
        %1052 = vmatprep.subr.mxu0 0.0
        %1053 = vmatpush1.msra.mxu0 0.0
        %1054 = vmatprep.subr.mxu0 0.0
        %1055 = vmatpush1.msra.mxu0 0.0
        %1056 = vmatprep.subr.mxu0 0.0
        %1057 = vmatpush1.msra.mxu0 0.0
        %1058 = vmatprep.subr.mxu0 0.0
        %1059 = vmatpush1.msra.mxu0 0.0
        %1060 = vmatprep.subr.mxu0 0.0
        %1061 = vmatpush1.msra.mxu0 0.0
        %1062 = vmatprep.subr.mxu0 0.0
        %1063 = vmatpush1.msra.mxu0 0.0
        %1064 = vmatprep.subr.mxu0 0.0
        %1065 = vmatpush1.msra.mxu0 0.0
        %1066 = vmatprep.subr.mxu0 0.0
        %1067 = vmatpush1.msra.mxu0 0.0
        %1068 = vmatprep.subr.mxu0 0.0
        %1069 = vmatpush1.msra.mxu0 0.0
        %1070 = vmatprep.subr.mxu0 0.0
        %1071 = vmatpush1.msra.mxu0 0.0
        %1072 = vmatprep.subr.mxu0 0.0
        %1073 = vmatpush1.msra.mxu0 0.0
        %1074 = vmatprep.subr.mxu0 0.0
        %1075 = vmatpush1.msra.mxu0 0.0
        %1076 = vmatprep.subr.mxu0 0.0
        %1077 = vmatpush1.msra.mxu0 0.0
        %1078 = vmatprep.mubr.f32.mxu0 0.0
        %1079 = vmatmul.mubr.f32.gmra.mrb[0].mxu0 %v1000
        %v1080 = vpop.f32.mrb[0].mxu0
        %v1081 = vadd.f32 %v997, %v1080
        %v1082 = vpop.f32.mrb[0].mxu0
        %1083 = vmatprep.mubr.f32.mxu0 0.0
        %1084 = vmatmul.mubr.f32.gmra.mrb[0].mxu0 %v1003
        %v1085 = vpop.f32.mrb[0].mxu0
        %v1086 = vadd.f32 %v997, %v1085
        %v1087 = vpop.f32.mrb[0].mxu0
        %1088 = vmatprep.mubr.f32.mxu0 0.0
        %1089 = vmatmul.mubr.f32.gmra.mrb[0].mxu0 %v1006
        %v1090 = vpop.f32.mrb[0].mxu0
        %v1091 = vadd.f32 %v997, %v1090
        %v1092 = vpop.f32.mrb[0].mxu0
        %1093 = vmatprep.mubr.f32.mxu0 0.0
        %1094 = vmatmul.mubr.f32.gmra.mrb[0].mxu0 %v1009
        %v1095 = vpop.f32.mrb[0].mxu0
        %v1096 = vadd.f32 %v997, %v1095
        %v1097 = vpop.f32.mrb[0].mxu0
        %1098 = vdwg.mxu0
        %v1099 = vmax.f32 %v1081, 0.0
        %v1100 = vmax.f32 %v1086, 0.0
        %v1101 = vmax.f32 %v1091, 0.0
        %v1102 = vmax.f32 %v1096, 0.0
        %v1103 = vld [vmem:[%s9] sm:$0xff]
        %v1104 = vld [vmem:[%s9 + $0x8] sm:$0xff]
        %v1105 = vld [vmem:[%s9 + $0x10] sm:$0xff]
        %v1106 = vld [vmem:[%s9 + $0x18] sm:$0xff]
        %v1107 = vld [vmem:[%s9 + $0x20] sm:$0xff]
        %v1108 = vld [vmem:[%s9 + $0x28] sm:$0xff]
        %v1109 = vld [vmem:[%s9 + $0x30] sm:$0x3]
        %v1110 = vld [vmem:[#allocation11] sm:$0x1]
        %v1112 = vlaneseq
        %v1113 = vshrl.u32 %v1112, 7
        %v1114 = vsub.s32 0, %v1113
        %v1115 = vrot.slane %v1110, %v1114
        %v1118 = vsel %vm761, %v1099, 0
        %v1121 = vsel %vm761, %v1100, 0
        %v1124 = vsel %vm761, %v1101, 0
        %v1127 = vsel %vm761, %v1102, 0
        %v1130 = vsel %vm774, %v1109, 0
        %1132 = vmatprep.subr.mxu0 0.0
        %1133 = vmatpush1.msra.mxu0 %v1103
        %1134 = vmatprep.subr.mxu0 0.0
        %1135 = vmatpush1.msra.mxu0 %v1104
        %1136 = vmatprep.subr.mxu0 0.0
        %1137 = vmatpush1.msra.mxu0 %v1105
        %1138 = vmatprep.subr.mxu0 0.0
        %1139 = vmatpush1.msra.mxu0 %v1106
        %1140 = vmatprep.subr.mxu0 0.0
        %1141 = vmatpush1.msra.mxu0 %v1107
        %1142 = vmatprep.subr.mxu0 0.0
        %1143 = vmatpush1.msra.mxu0 %v1108
        %1144 = vmatprep.subr.mxu0 0.0
        %1145 = vmatpush1.msra.mxu0 %v1130
        %1146 = vmatprep.subr.mxu0 0.0
        %1147 = vmatpush1.msra.mxu0 0.0
        %1148 = vmatprep.subr.mxu0 0.0
        %1149 = vmatpush1.msra.mxu0 0.0
        %1150 = vmatprep.subr.mxu0 0.0
        %1151 = vmatpush1.msra.mxu0 0.0
        %1152 = vmatprep.subr.mxu0 0.0
        %1153 = vmatpush1.msra.mxu0 0.0
        %1154 = vmatprep.subr.mxu0 0.0
        %1155 = vmatpush1.msra.mxu0 0.0
        %1156 = vmatprep.subr.mxu0 0.0
        %1157 = vmatpush1.msra.mxu0 0.0
        %1158 = vmatprep.subr.mxu0 0.0
        %1159 = vmatpush1.msra.mxu0 0.0
        %1160 = vmatprep.subr.mxu0 0.0
        %1161 = vmatpush1.msra.mxu0 0.0
        %1162 = vmatprep.subr.mxu0 0.0
        %1163 = vmatpush1.msra.mxu0 0.0
        %1164 = vmatprep.subr.mxu0 0.0
        %1165 = vmatpush1.msra.mxu0 0.0
        %1166 = vmatprep.subr.mxu0 0.0
        %1167 = vmatpush1.msra.mxu0 0.0
        %1168 = vmatprep.subr.mxu0 0.0
        %1169 = vmatpush1.msra.mxu0 0.0
        %1170 = vmatprep.subr.mxu0 0.0
        %1171 = vmatpush1.msra.mxu0 0.0
        %1172 = vmatprep.subr.mxu0 0.0
        %1173 = vmatpush1.msra.mxu0 0.0
        %1174 = vmatprep.subr.mxu0 0.0
        %1175 = vmatpush1.msra.mxu0 0.0
        %1176 = vmatprep.subr.mxu0 0.0
        %1177 = vmatpush1.msra.mxu0 0.0
        %1178 = vmatprep.subr.mxu0 0.0
        %1179 = vmatpush1.msra.mxu0 0.0
        %1180 = vmatprep.subr.mxu0 0.0
        %1181 = vmatpush1.msra.mxu0 0.0
        %1182 = vmatprep.subr.mxu0 0.0
        %1183 = vmatpush1.msra.mxu0 0.0
        %1184 = vmatprep.subr.mxu0 0.0
        %1185 = vmatpush1.msra.mxu0 0.0
        %1186 = vmatprep.subr.mxu0 0.0
        %1187 = vmatpush1.msra.mxu0 0.0
        %1188 = vmatprep.subr.mxu0 0.0
        %1189 = vmatpush1.msra.mxu0 0.0
        %1190 = vmatprep.subr.mxu0 0.0
        %1191 = vmatpush1.msra.mxu0 0.0
        %1192 = vmatprep.subr.mxu0 0.0
        %1193 = vmatpush1.msra.mxu0 0.0
        %1194 = vmatprep.subr.mxu0 0.0
        %1195 = vmatpush1.msra.mxu0 0.0
        %1196 = vmatprep.mubr.f32.mxu0 0.0
        %1197 = vmatmul.mubr.f32.gmra.mrb[0].mxu0 %v1118
        %v1198 = vpop.f32.mrb[0].mxu0
        %v1199 = vadd.f32 %v1115, %v1198
        %v1200 = vpop.f32.mrb[0].mxu0
        %1201 = vmatprep.mubr.f32.mxu0 0.0
        %1202 = vmatmul.mubr.f32.gmra.mrb[0].mxu0 %v1121
        %v1203 = vpop.f32.mrb[0].mxu0
        %v1204 = vadd.f32 %v1115, %v1203
        %v1205 = vpop.f32.mrb[0].mxu0
        %1206 = vmatprep.mubr.f32.mxu0 0.0
        %1207 = vmatmul.mubr.f32.gmra.mrb[0].mxu0 %v1124
        %v1208 = vpop.f32.mrb[0].mxu0
        %v1209 = vadd.f32 %v1115, %v1208
        %v1210 = vpop.f32.mrb[0].mxu0
        %1211 = vmatprep.mubr.f32.mxu0 0.0
        %1212 = vmatmul.mubr.f32.gmra.mrb[0].mxu0 %v1127
        %v1213 = vpop.f32.mrb[0].mxu0
        %v1214 = vadd.f32 %v1115, %v1213
        %v1215 = vpop.f32.mrb[0].mxu0
        %1216 = vdwg.mxu0
        %v1217 = vmax.f32 %v1199, 0.0
        %v1218 = vmax.f32 %v1204, 0.0
        %v1219 = vmax.f32 %v1209, 0.0
        %v1220 = vmax.f32 %v1214, 0.0
        %v1221 = vld [vmem:[#allocation13] sm:$0xff]
        %v1222 = vld [vmem:[#allocation13 + $0x8] sm:$0xff]
        %v1223 = vld [vmem:[#allocation13 + $0x10] sm:$0xff]
        %v1224 = vld [vmem:[#allocation13 + $0x18] sm:$0xff]
        %v1225 = vld [vmem:[#allocation13 + $0x20] sm:$0xff]
        %v1226 = vld [vmem:[#allocation13 + $0x28] sm:$0xff]
        %v1227 = vld [vmem:[#allocation13 + $0x30] sm:$0x3]
        %v1228 = vld [vmem:[%s12] sm:$0x1]
        %v1230 = vlaneseq
        %v1231 = vshrl.u32 %v1230, 7
        %v1232 = vsub.s32 0, %v1231
        %v1233 = vrot.slane %v1228, %v1232
        %v1236 = vsel %vm761, %v1217, 0
        %v1239 = vsel %vm761, %v1218, 0
        %v1242 = vsel %vm761, %v1219, 0
        %v1245 = vsel %vm761, %v1220, 0
        %v1248 = vsel %vm774, %v1227, 0
        %1250 = vmatprep.subr.mxu0 0.0
        %1251 = vmatpush1.msra.mxu0 %v1221
        %1252 = vmatprep.subr.mxu0 0.0
        %1253 = vmatpush1.msra.mxu0 %v1222
        %1254 = vmatprep.subr.mxu0 0.0
        %1255 = vmatpush1.msra.mxu0 %v1223
        %1256 = vmatprep.subr.mxu0 0.0
        %1257 = vmatpush1.msra.mxu0 %v1224
        %1258 = vmatprep.subr.mxu0 0.0
        %1259 = vmatpush1.msra.mxu0 %v1225
        %1260 = vmatprep.subr.mxu0 0.0
        %1261 = vmatpush1.msra.mxu0 %v1226
        %1262 = vmatprep.subr.mxu0 0.0
        %1263 = vmatpush1.msra.mxu0 %v1248
        %1264 = vmatprep.subr.mxu0 0.0
        %1265 = vmatpush1.msra.mxu0 0.0
        %1266 = vmatprep.subr.mxu0 0.0
        %1267 = vmatpush1.msra.mxu0 0.0
        %1268 = vmatprep.subr.mxu0 0.0
        %1269 = vmatpush1.msra.mxu0 0.0
        %1270 = vmatprep.subr.mxu0 0.0
        %1271 = vmatpush1.msra.mxu0 0.0
        %1272 = vmatprep.subr.mxu0 0.0
        %1273 = vmatpush1.msra.mxu0 0.0
        %1274 = vmatprep.subr.mxu0 0.0
        %1275 = vmatpush1.msra.mxu0 0.0
        %1276 = vmatprep.subr.mxu0 0.0
        %1277 = vmatpush1.msra.mxu0 0.0
        %1278 = vmatprep.subr.mxu0 0.0
        %1279 = vmatpush1.msra.mxu0 0.0
        %1280 = vmatprep.subr.mxu0 0.0
        %1281 = vmatpush1.msra.mxu0 0.0
        %1282 = vmatprep.subr.mxu0 0.0
        %1283 = vmatpush1.msra.mxu0 0.0
        %1284 = vmatprep.subr.mxu0 0.0
        %1285 = vmatpush1.msra.mxu0 0.0
        %1286 = vmatprep.subr.mxu0 0.0
        %1287 = vmatpush1.msra.mxu0 0.0
        %1288 = vmatprep.subr.mxu0 0.0
        %1289 = vmatpush1.msra.mxu0 0.0
        %1290 = vmatprep.subr.mxu0 0.0
        %1291 = vmatpush1.msra.mxu0 0.0
        %1292 = vmatprep.subr.mxu0 0.0
        %1293 = vmatpush1.msra.mxu0 0.0
        %1294 = vmatprep.subr.mxu0 0.0
        %1295 = vmatpush1.msra.mxu0 0.0
        %1296 = vmatprep.subr.mxu0 0.0
        %1297 = vmatpush1.msra.mxu0 0.0
        %1298 = vmatprep.subr.mxu0 0.0
        %1299 = vmatpush1.msra.mxu0 0.0
        %1300 = vmatprep.subr.mxu0 0.0
        %1301 = vmatpush1.msra.mxu0 0.0
        %1302 = vmatprep.subr.mxu0 0.0
        %1303 = vmatpush1.msra.mxu0 0.0
        %1304 = vmatprep.subr.mxu0 0.0
        %1305 = vmatpush1.msra.mxu0 0.0
        %1306 = vmatprep.subr.mxu0 0.0
        %1307 = vmatpush1.msra.mxu0 0.0
        %1308 = vmatprep.subr.mxu0 0.0
        %1309 = vmatpush1.msra.mxu0 0.0
        %1310 = vmatprep.subr.mxu0 0.0
        %1311 = vmatpush1.msra.mxu0 0.0
        %1312 = vmatprep.subr.mxu0 0.0
        %1313 = vmatpush1.msra.mxu0 0.0
        %1314 = vmatprep.mubr.f32.mxu0 0.0
        %1315 = vmatmul.mubr.f32.gmra.mrb[0].mxu0 %v1236
        %v1316 = vpop.f32.mrb[0].mxu0
        %v1317 = vadd.f32 %v1233, %v1316
        %v1318 = vpop.f32.mrb[0].mxu0
        %1319 = vmatprep.mubr.f32.mxu0 0.0
        %1320 = vmatmul.mubr.f32.gmra.mrb[0].mxu0 %v1239
        %v1321 = vpop.f32.mrb[0].mxu0
        %v1322 = vadd.f32 %v1233, %v1321
        %v1323 = vpop.f32.mrb[0].mxu0
        %1324 = vmatprep.mubr.f32.mxu0 0.0
        %1325 = vmatmul.mubr.f32.gmra.mrb[0].mxu0 %v1242
        %v1326 = vpop.f32.mrb[0].mxu0
        %v1327 = vadd.f32 %v1233, %v1326
        %v1328 = vpop.f32.mrb[0].mxu0
        %1329 = vmatprep.mubr.f32.mxu0 0.0
        %1330 = vmatmul.mubr.f32.gmra.mrb[0].mxu0 %v1245
        %v1331 = vpop.f32.mrb[0].mxu0
        %v1332 = vadd.f32 %v1233, %v1331
        %v1333 = vpop.f32.mrb[0].mxu0
        %1334 = vdwg.mxu0
        %v1335 = vmax.f32 %v1317, 0.0
        %v1336 = vmax.f32 %v1322, 0.0
        %v1337 = vmax.f32 %v1327, 0.0
        %v1338 = vmax.f32 %v1332, 0.0
        %1339 = vrot.lane.b32.xlu0 %v863, 50
        %v1340 = vpop.permute.xlu0 %1339
        %1341 = vrot.lane.b32.xlu0 %v864, 50
        %v1342 = vpop.permute.xlu0 %1341
        %1343 = vrot.lane.b32.xlu0 %v865, 50
        %v1344 = vpop.permute.xlu0 %1343
        %1345 = vrot.lane.b32.xlu0 %v866, 50
        %v1346 = vpop.permute.xlu0 %1345
        %1351 = vrot.lane.b32.xlu0 %v981, 100
        %v1352 = vpop.permute.xlu0 %1351
        %1353 = vrot.lane.b32.xlu0 %v982, 100
        %v1354 = vpop.permute.xlu0 %1353
        %1355 = vrot.lane.b32.xlu0 %v983, 100
        %v1356 = vpop.permute.xlu0 %1355
        %1357 = vrot.lane.b32.xlu0 %v984, 100
        %v1358 = vpop.permute.xlu0 %1357
        %1363 = vrot.lane.b32.xlu0 %v1099, 22
        %v1364 = vpop.permute.xlu0 %1363
        %1365 = vrot.lane.b32.xlu0 %v1100, 22
        %v1366 = vpop.permute.xlu0 %1365
        %1367 = vrot.lane.b32.xlu0 %v1101, 22
        %v1368 = vpop.permute.xlu0 %1367
        %1369 = vrot.lane.b32.xlu0 %v1102, 22
        %v1370 = vpop.permute.xlu0 %1369
        %1375 = vrot.lane.b32.xlu0 %v1217, 72
        %v1376 = vpop.permute.xlu0 %1375
        %1377 = vrot.lane.b32.xlu0 %v1218, 72
        %v1378 = vpop.permute.xlu0 %1377
        %1379 = vrot.lane.b32.xlu0 %v1219, 72
        %v1380 = vpop.permute.xlu0 %1379
        %1381 = vrot.lane.b32.xlu0 %v1220, 72
        %v1382 = vpop.permute.xlu0 %1381
        %1391 = vrot.lane.b32.xlu0 %v1335, 122
        %v1392 = vpop.permute.xlu0 %1391
        %1393 = vrot.lane.b32.xlu0 %v1336, 122
        %v1394 = vpop.permute.xlu0 %1393
        %1395 = vrot.lane.b32.xlu0 %v1337, 122
        %v1396 = vpop.permute.xlu0 %1395
        %1397 = vrot.lane.b32.xlu0 %v1338, 122
        %v1398 = vpop.permute.xlu0 %1397
        %v1403 = vsel %vm761, %v743, %v1340
        %v1404 = vsel %vm761, %v744, %v1342
        %v1405 = vsel %vm761, %v745, %v1344
        %v1406 = vsel %vm761, %v746, %v1346
        %vm1407 = vcmask 818176
        %v1408 = vsel %vm1407, %v1403, %v1352
        %v1409 = vsel %vm1407, %v1404, %v1354
        %v1410 = vsel %vm1407, %v1405, %v1356
        %v1411 = vsel %vm1407, %v1406, %v1358
        %vm1412 = vcmask 179200
        %v1413 = vsel %vm1412, %v1352, %v1364
        %v1414 = vsel %vm1412, %v1354, %v1366
        %v1415 = vsel %vm1412, %v1356, %v1368
        %v1416 = vsel %vm1412, %v1358, %v1370
        %vm1417 = vcmask 588800
        %v1418 = vsel %vm1417, %v1413, %v1376
        %v1419 = vsel %vm1417, %v1414, %v1378
        %v1420 = vsel %vm1417, %v1415, %v1380
        %v1421 = vsel %vm1417, %v1416, %v1382
        %vm1422 = vcmask 998400
        %v1423 = vsel %vm1422, %v1418, %v1392
        %v1424 = vsel %vm1422, %v1419, %v1394
        %v1425 = vsel %vm1422, %v1420, %v1396
        %v1426 = vsel %vm1422, %v1421, %v1398
        %1427 = vst [vmem:[%s608] sm:$0xff] %v1408
        %1428 = vst [vmem:[%s608 + $0x8] sm:$0xff] %v1423
        %vm1429 = vcmask 359424
        %1430 = vst.msk [vmem:[%s608 + $0x10] sm:$0xff] %vm1429, %v1392
        %1431 = vst [vmem:[%s608 + $0x18] sm:$0xff] %v1409
        %1432 = vst [vmem:[%s608 + $0x20] sm:$0xff] %v1424
        %1433 = vst.msk [vmem:[%s608 + $0x28] sm:$0xff] %vm1429, %v1394
        %1434 = vst [vmem:[%s608 + $0x30] sm:$0xff] %v1410
        %1435 = vst [vmem:[%s608 + $0x38] sm:$0xff] %v1425
        %1436 = vst.msk [vmem:[%s608 + $0x40] sm:$0xff] %vm1429, %v1396
        %1437 = vst [vmem:[%s608 + $0x48] sm:$0xff] %v1411
        %1438 = vst [vmem:[%s608 + $0x50] sm:$0xff] %v1426
        %1439 = vst.msk [vmem:[%s608 + $0x58] sm:$0xff] %vm1429, %v1398
        %v1440 = vld [vmem:[%s13] sm:$0xff]
        %v1441 = vld [vmem:[%s13 + $0x8] sm:$0xff]
        %v1442 = vld [vmem:[%s13 + $0x10] sm:$0xff]
        %v1443 = vld [vmem:[%s13 + $0x18] sm:$0xff]
        %v1444 = vld [vmem:[%s13 + $0x20] sm:$0xff]
        %v1445 = vld [vmem:[%s13 + $0x28] sm:$0xff]
        %v1446 = vld [vmem:[%s13 + $0x30] sm:$0x3]
        %v1447 = vld [vmem:[%s14] sm:$0x1]
        %v1449 = vlaneseq
        %v1450 = vshrl.u32 %v1449, 7
        %v1451 = vsub.s32 0, %v1450
        %v1452 = vrot.slane %v1447, %v1451
        %v1454 = vsel %vm761, %v1335, 0
        %v1456 = vsel %vm761, %v1336, 0
        %v1458 = vsel %vm761, %v1337, 0
        %v1460 = vsel %vm761, %v1338, 0
        %v1463 = vsel %vm774, %v1446, 0
        %1465 = vmatprep.subr.mxu0 0.0
        %1466 = vmatpush1.msra.mxu0 %v1440
        %1467 = vmatprep.subr.mxu0 0.0
        %1468 = vmatpush1.msra.mxu0 %v1441
        %1469 = vmatprep.subr.mxu0 0.0
        %1470 = vmatpush1.msra.mxu0 %v1442
        %1471 = vmatprep.subr.mxu0 0.0
        %1472 = vmatpush1.msra.mxu0 %v1443
        %1473 = vmatprep.subr.mxu0 0.0
        %1474 = vmatpush1.msra.mxu0 %v1444
        %1475 = vmatprep.subr.mxu0 0.0
        %1476 = vmatpush1.msra.mxu0 %v1445
        %1477 = vmatprep.subr.mxu0 0.0
        %1478 = vmatpush1.msra.mxu0 %v1463
        %1479 = vmatprep.subr.mxu0 0.0
        %1480 = vmatpush1.msra.mxu0 0.0
        %1481 = vmatprep.subr.mxu0 0.0
        %1482 = vmatpush1.msra.mxu0 0.0
        %1483 = vmatprep.subr.mxu0 0.0
        %1484 = vmatpush1.msra.mxu0 0.0
        %1485 = vmatprep.subr.mxu0 0.0
        %1486 = vmatpush1.msra.mxu0 0.0
        %1487 = vmatprep.subr.mxu0 0.0
        %1488 = vmatpush1.msra.mxu0 0.0
        %1489 = vmatprep.subr.mxu0 0.0
        %1490 = vmatpush1.msra.mxu0 0.0
        %1491 = vmatprep.subr.mxu0 0.0
        %1492 = vmatpush1.msra.mxu0 0.0
        %1493 = vmatprep.subr.mxu0 0.0
        %1494 = vmatpush1.msra.mxu0 0.0
        %1495 = vmatprep.subr.mxu0 0.0
        %1496 = vmatpush1.msra.mxu0 0.0
        %1497 = vmatprep.subr.mxu0 0.0
        %1498 = vmatpush1.msra.mxu0 0.0
        %1499 = vmatprep.subr.mxu0 0.0
        %1500 = vmatpush1.msra.mxu0 0.0
        %1501 = vmatprep.subr.mxu0 0.0
        %1502 = vmatpush1.msra.mxu0 0.0
        %1503 = vmatprep.subr.mxu0 0.0
        %1504 = vmatpush1.msra.mxu0 0.0
        %1505 = vmatprep.subr.mxu0 0.0
        %1506 = vmatpush1.msra.mxu0 0.0
        %1507 = vmatprep.subr.mxu0 0.0
        %1508 = vmatpush1.msra.mxu0 0.0
        %1509 = vmatprep.subr.mxu0 0.0
        %1510 = vmatpush1.msra.mxu0 0.0
        %1511 = vmatprep.subr.mxu0 0.0
        %1512 = vmatpush1.msra.mxu0 0.0
        %1513 = vmatprep.subr.mxu0 0.0
        %1514 = vmatpush1.msra.mxu0 0.0
        %1515 = vmatprep.subr.mxu0 0.0
        %1516 = vmatpush1.msra.mxu0 0.0
        %1517 = vmatprep.subr.mxu0 0.0
        %1518 = vmatpush1.msra.mxu0 0.0
        %1519 = vmatprep.subr.mxu0 0.0
        %1520 = vmatpush1.msra.mxu0 0.0
        %1521 = vmatprep.subr.mxu0 0.0
        %1522 = vmatpush1.msra.mxu0 0.0
        %1523 = vmatprep.subr.mxu0 0.0
        %1524 = vmatpush1.msra.mxu0 0.0
        %1525 = vmatprep.subr.mxu0 0.0
        %1526 = vmatpush1.msra.mxu0 0.0
        %1527 = vmatprep.subr.mxu0 0.0
        %1528 = vmatpush1.msra.mxu0 0.0
        %1529 = vmatprep.mubr.f32.mxu0 0.0
        %1530 = vmatmul.mubr.f32.gmra.mrb[0].mxu0 %v1454
        %v1531 = vpop.f32.mrb[0].mxu0
        %v1532 = vadd.f32 %v1452, %v1531
        %v1533 = vpop.f32.mrb[0].mxu0
        %1534 = vmatprep.mubr.f32.mxu0 0.0
        %1535 = vmatmul.mubr.f32.gmra.mrb[0].mxu0 %v1456
        %v1536 = vpop.f32.mrb[0].mxu0
        %v1537 = vadd.f32 %v1452, %v1536
        %v1538 = vpop.f32.mrb[0].mxu0
        %1539 = vmatprep.mubr.f32.mxu0 0.0
        %1540 = vmatmul.mubr.f32.gmra.mrb[0].mxu0 %v1458
        %v1541 = vpop.f32.mrb[0].mxu0
        %v1542 = vadd.f32 %v1452, %v1541
        %v1543 = vpop.f32.mrb[0].mxu0
        %1544 = vmatprep.mubr.f32.mxu0 0.0
        %1545 = vmatmul.mubr.f32.gmra.mrb[0].mxu0 %v1460
        %v1546 = vpop.f32.mrb[0].mxu0
        %v1547 = vadd.f32 %v1452, %v1546
        %v1548 = vpop.f32.mrb[0].mxu0
        %1549 = vdwg.mxu0
        %1550 = vst.msk [vmem:[%s627] sm:$0xff] %vm641, %v1532
        %1551 = vst.msk [vmem:[%s627 + $0x8] sm:$0xff] %vm641, %v1537
        %1552 = vst.msk [vmem:[%s627 + $0x10] sm:$0xff] %vm641, %v1542
        %1553 = vst.msk [vmem:[%s627 + $0x18] sm:$0xff] %vm641, %v1547
        %s1554 = sand.u32 %s363, 1
        %s1555 = scalar_lea.sflag [#allocation4], %s1554
        %s1556 = sand.u32 %s363, 1
        %s1557 = smul.addr %s1556, 96
        %s1558 = scalar_lea.vmem [#allocation14], %s1557
        %s1559 = smul.u32 4, %s35
        %p1560 = scmp.lt.s32.totalorder %s1559, 7
        %s1561 = scalar_select %p1560, %s1559, 7
        %s1562 = smul.addr %s1561, 8
        %s1563 = scalar_lea.vmem %s16, %s1562
        // Predicated region
        $region109: #{tpu_custom_call.1} parent=79 // pred_check
          %p1564 = pneg %p373
        $region110: #{tpu_custom_call.1} parent=79 // pred_check_branch
          %1566 = sbr.rel (%p1564) target = $region112
        $region111: #{tpu_custom_call.1} parent=79 // pred_region
          %s1567 = smul.u32 4, %s35
          %s1569 = ssub.s32 1536, 1536
          %1570 = vsyncadd %s1555, %s1569
          %s1571 = smul.addr %s1567, 3
          %s1572 = smul.addr %s1571, 128
          %s1573 = scalar_lea.hbm %s15, %s1572
          %s1574 = sshll.u32 %s1558, 4
          %s1575 = int_to_ptr.vmem [resolvable:$true] %s1574
          %1580 = dma.vmem_to_hbm [thread:$0]  %s1575, 1536, %s1573, %s1555, 384, 384, 24
        $region112: #{tpu_custom_call.1} parent=79 // pred_fallthru
          _
        // Predicated region
        $region113: #{tpu_custom_call.1} parent=79 // pred_check
          %p1581 = pneg %p399
        $region114: #{tpu_custom_call.1} parent=79 // pred_check_branch
          %1583 = sbr.rel (%p1581) target = $region116
        $region115: #{tpu_custom_call.1} parent=79 // pred_region
          %s1584 = smul.u32 4, %s35
        $region116: #{tpu_custom_call.1} parent=79 // pred_fallthru
          _
      $region80: #{tpu_custom_call.1} parent=5 // pred_fallthru
        _
      %p1585 = scmp.le.s32.totalorder 2, %s30
      // Predicated region
      $region117: #{tpu_custom_call.1} parent=5 // pred_check
        %p1586 = pneg %p1585
      $region118: #{tpu_custom_call.1} parent=5 // pred_check_branch
        %1588 = sbr.rel (%p1586) target = $region120
      $region119: #{tpu_custom_call.1} parent=5 // pred_region
        %s1589 = ssub.s32 %s30, 2
        // Predicated region
        $region121: #{tpu_custom_call.1} parent=119 // pred_check
          %p1590 = pneg %p379
        $region122: #{tpu_custom_call.1} parent=119 // pred_check_branch
          %1592 = sbr.rel (%p1590) target = $region124
        $region123: #{tpu_custom_call.1} parent=119 // pred_region
          %s1593 = sand.u32 %s364, 1
          %s1594 = scalar_lea.sflag [#allocation4], %s1593
          %s1595 = sand.u32 %s364, 1
          %s1596 = smul.addr %s1595, 96
          %s1597 = scalar_lea.vmem [#allocation14], %s1596
          %1598 = dma.done %s1594, 1536
        $region124: #{tpu_custom_call.1} parent=119 // pred_fallthru
          _
        // Predicated region
        $region125: #{tpu_custom_call.1} parent=119 // pred_check
          %p1599 = pneg %p405
        $region126: #{tpu_custom_call.1} parent=119 // pred_check_branch
          %1601 = sbr.rel (%p1599) target = $region128
        $region127: #{tpu_custom_call.1} parent=119 // pred_region
          %s1602 = smul.u32 4, %s36
          %p1603 = scmp.lt.s32.totalorder %s1602, 7
          %s1604 = scalar_select %p1603, %s1602, 7
          %s1605 = smul.addr %s1604, 8
          %s1606 = scalar_lea.vmem %s16, %s1605
        $region128: #{tpu_custom_call.1} parent=119 // pred_fallthru
          _
      $region120: #{tpu_custom_call.1} parent=5 // pred_fallthru
        _
    $region6: #{tpu_custom_call.1} parent=1 // loop_footer
      %s34 = sadd.s32 1, %s30
    $region7: #{tpu_custom_call.1} parent=1 // loop_footer_branch
      %29 = sbr.rel target = $region3
    $region8: #{tpu_custom_call.1} parent=1 // loop_exit
      _
    %1607 = vsyncpa [#allocation3], 1
    %s1608 = scalar_lea.sflag [#allocation3], 1
    %1609 = vsyncpa %s1608, 1
    %1610 = vsyncpa [#allocation6], 1
    %1611 = vsyncpa [#allocation9], 1
    %1612 = vsyncpa [#allocation12], 1
    %1613 = vsyncpa [#allocation4], 1
    %s1614 = scalar_lea.sflag [#allocation4], 1
    %1615 = vsyncpa %s1614, 1

</llo_original>
